<compile_context>
chip_gen: v7x
topology: tpu7x:2x2x1
jax: 0.10.0
libtpu: 0.0.40
codegen_flags: <defaults>
</compile_context>

<pallas_src>
import functools

import jax
import jax.numpy as jnp
from jax.experimental import pallas as pl
from jax.experimental.pallas import tpu as pltpu


def _upsamp_kernel(x_ref, w_ref, b_ref, o_ref, acc_ref, *, K, dilation, Wout, S):
    """One (sample, channel-block) grid step.

    x_ref  : (1, K*Cin, L)      bf16, kw-folded slab; kh shift = contiguous lane slice
    w_ref  : (K, tCout, K*Cin)  bf16, kh-major, (kw, ci)-fused contraction axis
    b_ref  : (tCout, 1)         f32
    o_ref  : (1, tCout, S)      out dtype, lane-dense (S on lanes)
    acc_ref: (tCout, S)         f32 VMEM scratch accumulator
    """
    for kh in range(K):
        off = kh * dilation * Wout                 # static lane offset of this kh shift
        rhs = x_ref[0, :, pl.ds(off, S)]           # [K*Cin, S]      bf16
        part = jnp.dot(w_ref[kh], rhs, preferred_element_type=jnp.float32)
        if kh == 0:
            acc_ref[...] = part                    # [tCout, S] f32
        else:
            acc_ref[...] += part
    acc = acc_ref[...] + b_ref[...]                # bias (broadcast over S)
    acc = jnp.maximum(acc, 0.0)                    # ReLU
    # InstanceNorm2d (affine=False, eps=1e-5): per-channel over spatial.
    # One-pass E[x]/E[x^2] in f32, variance clamped >= 0 (see review note on
    # cancellation; adequate for forward inference).
    inv_n = 1.0 / float(S)
    mean = jnp.sum(acc, axis=1, keepdims=True) * inv_n        # [tCout, 1]
    ex2 = jnp.sum(acc * acc, axis=1, keepdims=True) * inv_n
    var = jnp.maximum(ex2 - mean * mean, 0.0)
    o_ref[0] = ((acc - mean) * jax.lax.rsqrt(var + 1e-5)).astype(o_ref.dtype)


def upsamp_forward(x, weight, bias, *, kernel_size=4, stride=1, padding=3,
                   dilation=2, scale_factor=2, cout_tile=None,
                   out_dtype=None, stream_dtype=jnp.bfloat16):
    """x: [N, Cin, H, W] f32 (NCHW). weight: [Cout, Cin, K, K]. bias: [Cout].

    out_dtype: output dtype (default: x.dtype). Pass jnp.bfloat16 to halve the
    HBM writeback when the consumer is bf16.
    stream_dtype: dtype the activations/weights are streamed in (default bf16;
    pass jnp.float32 to keep weights+activations full precision).
    """
    N, Cin, H, W = x.shape
    Cout = weight.shape[0]
    K = kernel_size
    assert stride == 1 and (K - 1) * dilation == 2 * padding, "same-size conv expected"
    if out_dtype is None:
        out_dtype = x.dtype

    # ---- glue (plain JAX): nearest upsample + zero pad + kw pre-slice ----------
    x_up = jnp.repeat(jnp.repeat(x, scale_factor, axis=2), scale_factor, axis=3)
    H2, W2 = H * scale_factor, W * scale_factor
    x_pad = jnp.pad(x_up, ((0, 0), (0, 0), (padding, padding), (padding, padding)))
    Hp = H2 + 2 * padding
    Hout, Wout = H2, W2
    S = Hout * Wout
    L = Hp * Wout

    # kw pre-slice: K static contiguous column slices (no gather), stacked and
    # fused with Cin so the kernel contracts over K*Cin per dot.
    #   x_kw[n, kw*Cin + ci, y*Wout + ox] = x_pad[n, ci, y, ox + kw*dilation]
    # The kh-shifted tap is then a contiguous lane slice of length S at offset
    # kh*dilation*Wout, taken inside the kernel (no K*K im2col in HBM).
    slabs = [jax.lax.slice_in_dim(x_pad, kw * dilation, kw * dilation + Wout, axis=3)
             for kw in range(K)]                               # K x [N, Cin, Hp, Wout]
    x_kw = jnp.stack(slabs, axis=1)                            # [N, K, Cin, Hp, Wout]
    x_kw = x_kw.reshape(N, K * Cin, L).astype(stream_dtype)

    # Weights: [K(kh), Cout, K(kw)*Cin]; (kw, ci) order matches x_kw rows.
    w_r = jnp.transpose(weight, (2, 0, 3, 1)).reshape(K, Cout, K * Cin)
    w_r = w_r.astype(stream_dtype)
    b_col = bias.reshape(Cout, 1).astype(jnp.float32)

    # Channel-block grid axis: InstanceNorm is per-channel, so blocks are independent.
    if cout_tile is None:
        cout_tile = Cout if Cout <= 128 else 128
    assert Cout % cout_tile == 0 and cout_tile % 8 == 0
    n_cblk = Cout // cout_tile

    # Scoped-VMEM budget: double-buffered x / w / out blocks + f32 accumulator.
    st_isz = jnp.dtype(stream_dtype).itemsize
    out_isz = jnp.dtype(out_dtype).itemsize
    vmem_bytes = (2 * (K * Cin * L + K * cout_tile * K * Cin) * st_isz
                  + 2 * cout_tile * S * out_isz
                  + cout_tile * S * 4
                  + (2 << 20))                                  # slack
    vmem_limit = int(min(max(vmem_bytes, 32 << 20), 64 << 20))  # <= v7x physical

    kernel = functools.partial(_upsamp_kernel, K=K, dilation=dilation,
                               Wout=Wout, S=S)

    out = pl.pallas_call(
        kernel,
        out_shape=jax.ShapeDtypeStruct((N, Cout, S), out_dtype),
        grid_spec=pltpu.PrefetchScalarGridSpec(
            num_scalar_prefetch=0,
            grid=(N, n_cblk),
            in_specs=[
                # x: block index constant across j -> fetched once per sample
                pl.BlockSpec((1, K * Cin, L), lambda n, j: (n, 0, 0)),
                # weights / bias: re-DMA'd only when the channel block changes
                pl.BlockSpec((K, cout_tile, K * Cin), lambda n, j: (0, j, 0)),
                pl.BlockSpec((cout_tile, 1), lambda n, j: (j, 0)),
            ],
            out_specs=pl.BlockSpec((1, cout_tile, S), lambda n, j: (n, j, 0)),
            scratch_shapes=[pltpu.VMEM((cout_tile, S), jnp.float32)],
        ),
        compiler_params=pltpu.CompilerParams(
            dimension_semantics=("parallel", "parallel"),
            vmem_limit_bytes=vmem_limit),
    )(x_kw, w_r, b_col)

    # (N, Cout, S) -> NCHW is a free trailing-dim split (no transpose).
    return out.reshape(N, Cout, Hout, Wout)


def _reference(x, weight, bias):
    """Plain-JAX reference matching the PyTorch module (f32 throughout)."""
    x_up = jnp.repeat(jnp.repeat(x, 2, axis=2), 2, axis=3)
    y = jax.lax.conv_general_dilated(
        x_up, weight, window_strides=(1, 1), padding=((3, 3), (3, 3)),
        rhs_dilation=(2, 2), dimension_numbers=("NCHW", "OIHW", "NCHW"))
    y = y + bias[None, :, None, None]
    y = jnp.maximum(y, 0.0)
    mean = y.mean(axis=(2, 3), keepdims=True)
    var = ((y - mean) ** 2).mean(axis=(2, 3), keepdims=True)
    return (y - mean) * jax.lax.rsqrt(var + 1e-5)


if __name__ == "__main__":
    N, Cin, H, W = 2, 4, 16, 16
    Cout = 8

    key = jax.random.PRNGKey(0)
    k_x, k_w, k_b = jax.random.split(key, 3)
    x = jax.random.normal(k_x, (N, Cin, H, W), dtype=jnp.float32)
    weight = jax.random.normal(k_w, (Cout, Cin, 4, 4), dtype=jnp.float32) * 0.1
    bias = jax.random.normal(k_b, (Cout,), dtype=jnp.float32) * 0.1

    y_ref = jax.block_until_ready(_reference(x, weight, bias))

    # f32 output (module semantics).
    y = jax.block_until_ready(upsamp_forward(x, weight, bias))
    assert y.shape == (N, Cout, 2 * H, 2 * W), y.shape
    max_err = float(jnp.max(jnp.abs(y - y_ref)))
    assert max_err < 0.1, f"max abs error too large (f32 out): {max_err}"

    # bf16 output path (halved writeback; looser tolerance for output rounding).
    y_bf16 = jax.block_until_ready(
        upsamp_forward(x, weight, bias, out_dtype=jnp.bfloat16))
    max_err_bf16 = float(jnp.max(jnp.abs(y_bf16.astype(jnp.float32) - y_ref)))
    assert max_err_bf16 < 0.2, f"max abs error too large (bf16 out): {max_err_bf16}"

    print("KERNEL_OK")
</pallas_src>

<mosaic_0001>
module attributes {stable_mosaic.version = 11 : i64} {
  func.func @_upsamp_kernel(%arg0: i32, %arg1: i32, %arg2: memref<1x16x1216xbf16, #tpu.memory_space<vmem>>, %arg3: memref<4x8x16xbf16, #tpu.memory_space<vmem>>, %arg4: memref<8x1xf32, #tpu.memory_space<vmem>>, %arg5: memref<1x8x1024xf32, #tpu.memory_space<vmem>>, %arg6: memref<8x1024xf32, #tpu.memory_space<vmem>>) attributes {dimension_semantics = [#tpu.dimension_semantics<parallel>, #tpu.dimension_semantics<parallel>], iteration_bounds = array<i64: 2, 1>, scalar_prefetch = 0 : i64, scratch_operands = 1 : i64, tpu.core_type = #tpu.core_type<tc>, window_params = [{transform_indices = @transform_0, window_bounds = array<i64: 1, 16, 1216>}, {transform_indices = @transform_1, window_bounds = array<i64: 4, 8, 16>}, {transform_indices = @transform_2, window_bounds = array<i64: 8, 1>}, {transform_indices = @transform_3, window_bounds = array<i64: 1, 8, 1024>}]} {
    %c0 = arith.constant 0 : index
    %c0_0 = arith.constant 0 : index
    %c0_1 = arith.constant 0 : index
    %0 = vector.load %arg2[%c0, %c0_0, %c0_1] : memref<1x16x1216xbf16, #tpu.memory_space<vmem>>, vector<1x16x1024xbf16>
    %1 = vector.shape_cast %0 : vector<1x16x1024xbf16> to vector<16x1024xbf16>
    %c0_2 = arith.constant 0 : index
    %c0_3 = arith.constant 0 : index
    %c0_4 = arith.constant 0 : index
    %2 = vector.load %arg3[%c0_2, %c0_3, %c0_4] : memref<4x8x16xbf16, #tpu.memory_space<vmem>>, vector<1x8x16xbf16>
    %3 = vector.shape_cast %2 : vector<1x8x16xbf16> to vector<8x16xbf16>
    %cst = arith.constant dense<0.000000e+00> : vector<8x1024xf32>
    %4 = tpu.matmul %3, %1, %cst {dimension_numbers = #tpu.dot_dimension_numbers<[1], [0], [0], [1], [0, 0, 1, 1], [], []>} : vector<8x16xbf16>, vector<16x1024xbf16>, vector<8x1024xf32> -> vector<8x1024xf32>
    %c0_5 = arith.constant 0 : index
    %c0_6 = arith.constant 0 : index
    %5 = vector.load %arg6[%c0_5, %c0_6] : memref<8x1024xf32, #tpu.memory_space<vmem>>, vector<8x1024xf32>
    tpu.vector_store %arg6[%c0_5, %c0_6], %4 {strides = array<i32>} : memref<8x1024xf32, #tpu.memory_space<vmem>>, vector<8x1024xf32>,
    %c0_7 = arith.constant 0 : index
    %c0_8 = arith.constant 0 : index
    %c64 = arith.constant 64 : index
    %6 = vector.load %arg2[%c0_7, %c0_8, %c64] : memref<1x16x1216xbf16, #tpu.memory_space<vmem>>, vector<1x16x1024xbf16>
    %7 = vector.shape_cast %6 : vector<1x16x1024xbf16> to vector<16x1024xbf16>
    %c1 = arith.constant 1 : index
    %c0_9 = arith.constant 0 : index
    %c0_10 = arith.constant 0 : index
    %8 = vector.load %arg3[%c1, %c0_9, %c0_10] : memref<4x8x16xbf16, #tpu.memory_space<vmem>>, vector<1x8x16xbf16>
    %9 = vector.shape_cast %8 : vector<1x8x16xbf16> to vector<8x16xbf16>
    %cst_11 = arith.constant dense<0.000000e+00> : vector<8x1024xf32>
    %10 = tpu.matmul %9, %7, %cst_11 {dimension_numbers = #tpu.dot_dimension_numbers<[1], [0], [0], [1], [0, 0, 1, 1], [], []>} : vector<8x16xbf16>, vector<16x1024xbf16>, vector<8x1024xf32> -> vector<8x1024xf32>
    %c0_12 = arith.constant 0 : index
    %c0_13 = arith.constant 0 : index
    %11 = vector.load %arg6[%c0_12, %c0_13] : memref<8x1024xf32, #tpu.memory_space<vmem>>, vector<8x1024xf32>
    %12 = arith.addf %11, %10 : vector<8x1024xf32>
    %c0_14 = arith.constant 0 : index
    %c0_15 = arith.constant 0 : index
    %13 = vector.load %arg6[%c0_14, %c0_15] : memref<8x1024xf32, #tpu.memory_space<vmem>>, vector<8x1024xf32>
    tpu.vector_store %arg6[%c0_14, %c0_15], %12 {strides = array<i32>} : memref<8x1024xf32, #tpu.memory_space<vmem>>, vector<8x1024xf32>,
    %c0_16 = arith.constant 0 : index
    %c0_17 = arith.constant 0 : index
    %c128 = arith.constant 128 : index
    %14 = vector.load %arg2[%c0_16, %c0_17, %c128] : memref<1x16x1216xbf16, #tpu.memory_space<vmem>>, vector<1x16x1024xbf16>
    %15 = vector.shape_cast %14 : vector<1x16x1024xbf16> to vector<16x1024xbf16>
    %c2 = arith.constant 2 : index
    %c0_18 = arith.constant 0 : index
    %c0_19 = arith.constant 0 : index
    %16 = vector.load %arg3[%c2, %c0_18, %c0_19] : memref<4x8x16xbf16, #tpu.memory_space<vmem>>, vector<1x8x16xbf16>
    %17 = vector.shape_cast %16 : vector<1x8x16xbf16> to vector<8x16xbf16>
    %cst_20 = arith.constant dense<0.000000e+00> : vector<8x1024xf32>
    %18 = tpu.matmul %17, %15, %cst_20 {dimension_numbers = #tpu.dot_dimension_numbers<[1], [0], [0], [1], [0, 0, 1, 1], [], []>} : vector<8x16xbf16>, vector<16x1024xbf16>, vector<8x1024xf32> -> vector<8x1024xf32>
    %c0_21 = arith.constant 0 : index
    %c0_22 = arith.constant 0 : index
    %19 = vector.load %arg6[%c0_21, %c0_22] : memref<8x1024xf32, #tpu.memory_space<vmem>>, vector<8x1024xf32>
    %20 = arith.addf %19, %18 : vector<8x1024xf32>
    %c0_23 = arith.constant 0 : index
    %c0_24 = arith.constant 0 : index
    %21 = vector.load %arg6[%c0_23, %c0_24] : memref<8x1024xf32, #tpu.memory_space<vmem>>, vector<8x1024xf32>
    tpu.vector_store %arg6[%c0_23, %c0_24], %20 {strides = array<i32>} : memref<8x1024xf32, #tpu.memory_space<vmem>>, vector<8x1024xf32>,
    %c0_25 = arith.constant 0 : index
    %c0_26 = arith.constant 0 : index
    %c192 = arith.constant 192 : index
    %22 = vector.load %arg2[%c0_25, %c0_26, %c192] : memref<1x16x1216xbf16, #tpu.memory_space<vmem>>, vector<1x16x1024xbf16>
    %23 = vector.shape_cast %22 : vector<1x16x1024xbf16> to vector<16x1024xbf16>
    %c3 = arith.constant 3 : index
    %c0_27 = arith.constant 0 : index
    %c0_28 = arith.constant 0 : index
    %24 = vector.load %arg3[%c3, %c0_27, %c0_28] : memref<4x8x16xbf16, #tpu.memory_space<vmem>>, vector<1x8x16xbf16>
    %25 = vector.shape_cast %24 : vector<1x8x16xbf16> to vector<8x16xbf16>
    %cst_29 = arith.constant dense<0.000000e+00> : vector<8x1024xf32>
    %26 = tpu.matmul %25, %23, %cst_29 {dimension_numbers = #tpu.dot_dimension_numbers<[1], [0], [0], [1], [0, 0, 1, 1], [], []>} : vector<8x16xbf16>, vector<16x1024xbf16>, vector<8x1024xf32> -> vector<8x1024xf32>
    %c0_30 = arith.constant 0 : index
    %c0_31 = arith.constant 0 : index
    %27 = vector.load %arg6[%c0_30, %c0_31] : memref<8x1024xf32, #tpu.memory_space<vmem>>, vector<8x1024xf32>
    %28 = arith.addf %27, %26 : vector<8x1024xf32>
    %c0_32 = arith.constant 0 : index
    %c0_33 = arith.constant 0 : index
    %29 = vector.load %arg6[%c0_32, %c0_33] : memref<8x1024xf32, #tpu.memory_space<vmem>>, vector<8x1024xf32>
    tpu.vector_store %arg6[%c0_32, %c0_33], %28 {strides = array<i32>} : memref<8x1024xf32, #tpu.memory_space<vmem>>, vector<8x1024xf32>,
    %c0_34 = arith.constant 0 : index
    %c0_35 = arith.constant 0 : index
    %30 = vector.load %arg6[%c0_34, %c0_35] : memref<8x1024xf32, #tpu.memory_space<vmem>>, vector<8x1024xf32>
    %c0_36 = arith.constant 0 : index
    %c0_37 = arith.constant 0 : index
    %31 = vector.load %arg4[%c0_36, %c0_37] : memref<8x1xf32, #tpu.memory_space<vmem>>, vector<8x1xf32>
    %32 = vector.broadcast %31 : vector<8x1xf32> to vector<8x1024xf32>
    %33 = arith.addf %30, %32 : vector<8x1024xf32>
    %cst_38 = arith.constant 0.000000e+00 : f32
    %34 = vector.broadcast %cst_38 : f32 to vector<8x1024xf32>
    %35 = arith.maximumf %33, %34 : vector<8x1024xf32>
    %cst_39 = arith.constant dense<0.000000e+00> : vector<8xf32>
    %36 = vector.multi_reduction <add>, %35, %cst_39 [1] : vector<8x1024xf32> to vector<8xf32>
    %37 = vector.shape_cast %36 : vector<8xf32> to vector<8x1xf32>
    %cst_40 = arith.constant 9.765625E-4 : f32
    %38 = vector.broadcast %cst_40 : f32 to vector<8x1xf32>
    %39 = arith.mulf %37, %38 : vector<8x1xf32>
    %40 = arith.mulf %35, %35 : vector<8x1024xf32>
    %cst_41 = arith.constant dense<0.000000e+00> : vector<8xf32>
    %41 = vector.multi_reduction <add>, %40, %cst_41 [1] : vector<8x1024xf32> to vector<8xf32>
    %42 = vector.shape_cast %41 : vector<8xf32> to vector<8x1xf32>
    %cst_42 = arith.constant 9.765625E-4 : f32
    %43 = vector.broadcast %cst_42 : f32 to vector<8x1xf32>
    %44 = arith.mulf %42, %43 : vector<8x1xf32>
    %45 = arith.mulf %39, %39 : vector<8x1xf32>
    %46 = arith.subf %44, %45 : vector<8x1xf32>
    %cst_43 = arith.constant 0.000000e+00 : f32
    %47 = vector.broadcast %cst_43 : f32 to vector<8x1xf32>
    %48 = arith.maximumf %46, %47 : vector<8x1xf32>
    %49 = vector.broadcast %39 : vector<8x1xf32> to vector<8x1024xf32>
    %50 = arith.subf %35, %49 : vector<8x1024xf32>
    %cst_44 = arith.constant 9.99999974E-6 : f32
    %51 = vector.broadcast %cst_44 : f32 to vector<8x1xf32>
    %52 = arith.addf %48, %51 : vector<8x1xf32>
    %53 = math.rsqrt %52 : vector<8x1xf32>
    %54 = vector.broadcast %53 : vector<8x1xf32> to vector<8x1024xf32>
    %55 = arith.mulf %50, %54 : vector<8x1024xf32>
    %c0_45 = arith.constant 0 : index
    %c0_46 = arith.constant 0 : index
    %c0_47 = arith.constant 0 : index
    %56 = vector.load %arg5[%c0_45, %c0_46, %c0_47] : memref<1x8x1024xf32, #tpu.memory_space<vmem>>, vector<1x8x1024xf32>
    %57 = vector.shape_cast %56 : vector<1x8x1024xf32> to vector<8x1024xf32>
    %58 = vector.shape_cast %55 : vector<8x1024xf32> to vector<1x8x1024xf32>
    tpu.vector_store %arg5[%c0_45, %c0_46, %c0_47], %58 {strides = array<i32>} : memref<1x8x1024xf32, #tpu.memory_space<vmem>>, vector<1x8x1024xf32>,
    return
  }
  func.func @transform_0(%arg0: i32, %arg1: i32) -> (i32, i32, i32) {
    %c0_i32 = arith.constant 0 : i32
    %c0_i32_0 = arith.constant 0 : i32
    %c0_i32_1 = arith.constant 0 : i32
    return %arg0, %c0_i32, %c0_i32_0 : i32, i32, i32
  }
  func.func @transform_1(%arg0: i32, %arg1: i32) -> (i32, i32, i32) {
    %c0_i32 = arith.constant 0 : i32
    %c0_i32_0 = arith.constant 0 : i32
    %c0_i32_1 = arith.constant 0 : i32
    return %c0_i32, %arg1, %c0_i32_0 : i32, i32, i32
  }
  func.func @transform_2(%arg0: i32, %arg1: i32) -> (i32, i32) {
    %c0_i32 = arith.constant 0 : i32
    %c0_i32_0 = arith.constant 0 : i32
    return %arg1, %c0_i32 : i32, i32
  }
  func.func @transform_3(%arg0: i32, %arg1: i32) -> (i32, i32, i32) {
    %c0_i32 = arith.constant 0 : i32
    %c0_i32_0 = arith.constant 0 : i32
    return %arg0, %arg1, %c0_i32 : i32, i32, i32
  }
}

</mosaic_0001>

<llo_original>
// kernel: tpu_custom_call.1
$region0: #{tpu_custom_call.1}
  #allocation0 [shape = 'u32[]', space=smem, size = 0x4, offset = 0x4, fixed_abs, tag = 'smem constant byte address 0x4 - core index']
  #allocation1 [shape = 'u32[144,128]{1,0:T(1,128)}', space=vmem, size = 0x12000, scoped, tag = 'internal scratch']
  #allocation2 [shape = 'f32[8,1024]{1,0:T(8,128)}', space=vmem, size = 0x8000, scoped, tag = 'scratch operand']
  %s0 = inlined_call_operand.hbm [shape: bf16[2,16,1216], index: 0, kind: input, shape index: {}]
  %s1 = inlined_call_operand.hbm [shape: bf16[4,8,16], index: 1, kind: input, shape index: {}]
  %s2 = inlined_call_operand.vmem [shape: f32[8,1], index: 2, kind: input, shape index: {}]
  %s3 = inlined_call_operand.hbm [shape: f32[2,8,1024], index: 3, kind: output, shape index: {}]
  %s4 = sld [smem:[#allocation0]]
  $region53: #{tpu_custom_call.1} parent=0
    _
  %s6 = ssub.s32 1, %s4
  %s7 = scalar_select 0, %s6, %s4
  $region1: #{tpu_custom_call.1} parent=0
    #allocation3 [shape = 'u8[81920]{0}', space=vmem, size = 0x14000, scoped, tag = 'input window, operand 0']
    #allocation4 [shape = 's32[2]{0}', space=sflag, size = 0x8, scoped, tag = 'scoped memory for tpu_custom_call.1']
    #allocation5 [shape = 's32[2]{0}', space=sflag, size = 0x8, scoped, tag = 'scoped memory for tpu_custom_call.1']
    #allocation6 [shape = 'u8[8192]{0}', space=vmem, size = 0x2000, scoped, tag = 'input window, operand 1, single buffered']
    #allocation7 [shape = 's32[1]{0}', space=sflag, size = 0x4, scoped, tag = 'scoped memory for tpu_custom_call.1']
    #allocation8 [shape = 'u8[65536]{0}', space=vmem, size = 0x10000, scoped, tag = 'output window, operand 0']
    %8 = vsyncpa [#allocation4], 0
    %s9 = scalar_lea.sflag [#allocation4], 1
    %10 = vsyncpa %s9, 0
    %11 = vsyncpa [#allocation7], 0
    %12 = vsyncpa [#allocation5], 0
    %s13 = scalar_lea.sflag [#allocation5], 1
    %14 = vsyncpa %s13, 0
    loop: start=0, step=1, limit=4
    $region2: #{tpu_custom_call.1} parent=1 // loop_pre_header
      _
    $region3: #{tpu_custom_call.1} parent=1 // loop_header
      %s16 = sphi 0, %s20
      %p17 = scmp.ge.s32.totalorder %s16, 4
      %s23 = sphi 0, %s35
      %s24 = sphi 0, %s31
      %s25 = sphi 0, %s23
      %s26 = sphi 0, %s24
      %s27 = sphi 0, %s25
      %s28 = sphi 0, %s26
      %s38 = sphi 0, %s40
      %s41 = sphi 0, %s38
      %s42 = sphi 0, %s41
      %s58 = sphi 0, %s42
      %s64 = sphi 0, %s66
      %s67 = sphi 0, %s64
      %s68 = sphi 0, %s67
      %s84 = sphi 0, %s68
      %s90 = sphi 0, %s92
      %s93 = sphi 0, %s90
      %s94 = sphi 0, %s93
      %s110 = sphi 0, %s94
      %s118 = sphi 0, %s120
      %s121 = sphi 0, %s118
      %s122 = sphi 0, %s121
      %s138 = sphi 0, %s122
    $region4: #{tpu_custom_call.1} parent=1 // loop_header_branch
      %19 = sbr.rel (%p17) target = $region8
    $region5: #{tpu_custom_call.1} parent=1 // loop_body
      %s21 = ssub.s32 %s16, 1
      %s22 = ssub.s32 %s16, 2
      %s29 = sadd.s32 1, %s24
      %p30 = scmp.ge.s32.totalorder %s29, 1
      %s31 = scalar_select %p30, 0, %s29
      %s32 = sadd.s32 1, %s23
      %s33 = scalar_select %p30, %s32, %s23
      %p34 = scmp.ge.s32.totalorder %s33, 2
      %s35 = scalar_select %p34, 0, %s33
      %s36 = ssub.s32 %s23, %s35
      %p37 = scmp.eq.s32.totalorder %s36, 0
      %s39 = sadd.s32 %s38, 1
      %s40 = scalar_select %p37, %s38, %s39
      %p43 = pneg %p37
      %p44 = scmp.eq.s32.totalorder %s16, 1
      %p45 = por %p43, %p44
      %p46 = scmp.ne.s32.totalorder %s38, %s41
      %p47 = scmp.eq.s32.totalorder %s16, 0
      %p48 = por %p46, %p47
      %p49 = scmp.ne.s32.totalorder %s38, %s41
      %p50 = scmp.eq.s32.totalorder %s21, 1
      %p51 = por %p49, %p50
      %p52 = scmp.ne.s32.totalorder %s41, %s42
      %p53 = scmp.eq.s32.totalorder %s21, 0
      %p54 = por %p52, %p53
      %p55 = scmp.ne.s32.totalorder %s41, %s42
      %p56 = scmp.eq.s32.totalorder %s22, 1
      %p57 = por %p55, %p56
      %p59 = scmp.ne.s32.totalorder %s42, %s58
      %p60 = scmp.eq.s32.totalorder %s22, 0
      %p61 = por %p59, %p60
      %s62 = ssub.s32 %s24, %s31
      %p63 = scmp.eq.s32.totalorder %s62, 0
      %s65 = sadd.s32 %s64, 1
      %s66 = scalar_select %p63, %s64, %s65
      %p69 = pneg %p63
      %p70 = scmp.eq.s32.totalorder %s16, 1
      %p71 = por %p69, %p70
      %p72 = scmp.ne.s32.totalorder %s64, %s67
      %p73 = scmp.eq.s32.totalorder %s16, 0
      %p74 = por %p72, %p73
      %p75 = scmp.ne.s32.totalorder %s64, %s67
      %p76 = scmp.eq.s32.totalorder %s21, 1
      %p77 = por %p75, %p76
      %p78 = scmp.ne.s32.totalorder %s67, %s68
      %p79 = scmp.eq.s32.totalorder %s21, 0
      %p80 = por %p78, %p79
      %p81 = scmp.ne.s32.totalorder %s67, %s68
      %p82 = scmp.eq.s32.totalorder %s22, 1
      %p83 = por %p81, %p82
      %p85 = scmp.ne.s32.totalorder %s68, %s84
      %p86 = scmp.eq.s32.totalorder %s22, 0
      %p87 = por %p85, %p86
      %s88 = ssub.s32 %s24, %s31
      %p89 = scmp.eq.s32.totalorder %s88, 0
      %s91 = sadd.s32 %s90, 1
      %s92 = scalar_select %p89, %s90, %s91
      %p95 = pneg %p89
      %p96 = scmp.eq.s32.totalorder %s16, 1
      %p97 = por %p95, %p96
      %p98 = scmp.ne.s32.totalorder %s90, %s93
      %p99 = scmp.eq.s32.totalorder %s16, 0
      %p100 = por %p98, %p99
      %p101 = scmp.ne.s32.totalorder %s90, %s93
      %p102 = scmp.eq.s32.totalorder %s21, 1
      %p103 = por %p101, %p102
      %p104 = scmp.ne.s32.totalorder %s93, %s94
      %p105 = scmp.eq.s32.totalorder %s21, 0
      %p106 = por %p104, %p105
      %p107 = scmp.ne.s32.totalorder %s93, %s94
      %p108 = scmp.eq.s32.totalorder %s22, 1
      %p109 = por %p107, %p108
      %p111 = scmp.ne.s32.totalorder %s94, %s110
      %p112 = scmp.eq.s32.totalorder %s22, 0
      %p113 = por %p111, %p112
      %s114 = ssub.s32 %s23, %s35
      %s115 = ssub.s32 %s24, %s31
      %s116 = sor.u32 %s114, %s115
      %p117 = scmp.eq.s32.totalorder %s116, 0
      %s119 = sadd.s32 %s118, 1
      %s120 = scalar_select %p117, %s118, %s119
      %p123 = pneg %p117
      %p124 = scmp.eq.s32.totalorder %s16, 1
      %p125 = por %p123, %p124
      %p126 = scmp.ne.s32.totalorder %s118, %s121
      %p127 = scmp.eq.s32.totalorder %s16, 0
      %p128 = por %p126, %p127
      %p129 = scmp.ne.s32.totalorder %s118, %s121
      %p130 = scmp.eq.s32.totalorder %s21, 1
      %p131 = por %p129, %p130
      %p132 = scmp.ne.s32.totalorder %s121, %s122
      %p133 = scmp.eq.s32.totalorder %s21, 0
      %p134 = por %p132, %p133
      %p135 = scmp.ne.s32.totalorder %s121, %s122
      %p136 = scmp.eq.s32.totalorder %s22, 1
      %p137 = por %p135, %p136
      %p139 = scmp.ne.s32.totalorder %s122, %s138
      %p140 = scmp.eq.s32.totalorder %s22, 0
      %p141 = por %p139, %p140
      %p142 = scmp.le.s32.totalorder 1, %s16
      %p143 = scmp.lt.s32.totalorder %s16, 3
      %p144 = pnand %p142, %p143
      %p145 = pneg %p144
      // Predicated region
      $region9: #{tpu_custom_call.1} parent=5 // pred_check
        _
      $region10: #{tpu_custom_call.1} parent=5 // pred_check_branch
        %147 = sbr.rel (%p144) target = $region12
      $region11: #{tpu_custom_call.1} parent=5 // pred_region
        %s148 = ssub.s32 %s16, 1
        // Predicated region
        $region13: #{tpu_custom_call.1} parent=11 // pred_check
          %p149 = pneg %p80
        $region14: #{tpu_custom_call.1} parent=11 // pred_check_branch
          %151 = sbr.rel (%p149) target = $region16
        $region15: #{tpu_custom_call.1} parent=11 // pred_region
          %s153 = ssub.s32 256, 256
          %154 = vsyncadd [#allocation7], %s153
          %s155 = smul.addr %s26, 64
          %s156 = scalar_lea.hbm %s1, %s155
          %s157 = sshll.u32 [#allocation6], 4
          %s158 = int_to_ptr.vmem [resolvable:$true] %s157
          %163 = dma.hbm_to_vmem [thread:$0]  %s156, 256, %s158, [#allocation7], 64, 64, 4
        $region16: #{tpu_custom_call.1} parent=11 // pred_fallthru
          _
        // Predicated region
        $region17: #{tpu_custom_call.1} parent=11 // pred_check
          %p164 = pneg %p106
        $region18: #{tpu_custom_call.1} parent=11 // pred_check_branch
          %166 = sbr.rel (%p164) target = $region20
        $region19: #{tpu_custom_call.1} parent=11 // pred_region
          %p167 = scmp.lt.s32.totalorder %s26, 0
          %s168 = scalar_select %p167, %s26, 0
          %s169 = smul.addr %s168, 8
          %s170 = scalar_lea.vmem %s2, %s169
        $region20: #{tpu_custom_call.1} parent=11 // pred_fallthru
          _
      $region12: #{tpu_custom_call.1} parent=5 // pred_fallthru
        _
      %p171 = scmp.lt.s32.totalorder %s16, 2
      // Predicated region
      $region21: #{tpu_custom_call.1} parent=5 // pred_check
        %p172 = pneg %p171
      $region22: #{tpu_custom_call.1} parent=5 // pred_check_branch
        %174 = sbr.rel (%p172) target = $region24
      $region23: #{tpu_custom_call.1} parent=5 // pred_region
        // Predicated region
        $region25: #{tpu_custom_call.1} parent=23 // pred_check
          %p175 = pneg %p48
        $region26: #{tpu_custom_call.1} parent=23 // pred_check_branch
          %177 = sbr.rel (%p175) target = $region28
        $region27: #{tpu_custom_call.1} parent=23 // pred_region
          %s178 = sand.u32 %s38, 1
          %s179 = scalar_lea.sflag [#allocation4], %s178
          %s180 = sand.u32 %s38, 1
          %s181 = smul.addr %s180, 80
          %s182 = scalar_lea.vmem [#allocation3], %s181
          %s184 = ssub.s32 1280, 1280
          %185 = vsyncadd %s179, %s184
          %s186 = smul.addr %s23, 20
          %s187 = smul.addr %s186, 64
          %s188 = scalar_lea.hbm %s0, %s187
          %s189 = sshll.u32 %s182, 4
          %s190 = int_to_ptr.vmem [resolvable:$true] %s189
          %195 = dma.hbm_to_vmem [thread:$0]  %s188, 1280, %s190, %s179, 640, 640, 40
        $region28: #{tpu_custom_call.1} parent=23 // pred_fallthru
          _
      $region24: #{tpu_custom_call.1} parent=5 // pred_fallthru
        _
      %p196 = scmp.le.s32.totalorder 1, %s16
      %p197 = scmp.lt.s32.totalorder %s16, 3
      %p198 = pnand %p196, %p197
      %p199 = pneg %p198
      // Predicated region
      $region29: #{tpu_custom_call.1} parent=5 // pred_check
        _
      $region30: #{tpu_custom_call.1} parent=5 // pred_check_branch
        %201 = sbr.rel (%p198) target = $region32
      $region31: #{tpu_custom_call.1} parent=5 // pred_region
        %s202 = ssub.s32 %s16, 1
        %s203 = sand.u32 %s41, 1
        %s204 = scalar_lea.sflag [#allocation4], %s203
        %s205 = sand.u32 %s41, 1
        %s206 = smul.addr %s205, 80
        %s207 = scalar_lea.vmem [#allocation3], %s206
        // Predicated region
        $region33: #{tpu_custom_call.1} parent=31 // pred_check
          %p208 = pneg %p54
        $region34: #{tpu_custom_call.1} parent=31 // pred_check_branch
          %210 = sbr.rel (%p208) target = $region36
        $region35: #{tpu_custom_call.1} parent=31 // pred_region
          %211 = dma.done %s204, 1280
        $region36: #{tpu_custom_call.1} parent=31 // pred_fallthru
          _
        // Predicated region
        $region37: #{tpu_custom_call.1} parent=31 // pred_check
          %p212 = pneg %p80
        $region38: #{tpu_custom_call.1} parent=31 // pred_check_branch
          %214 = sbr.rel (%p212) target = $region40
        $region39: #{tpu_custom_call.1} parent=31 // pred_region
          %215 = dma.done [#allocation7], 256
        $region40: #{tpu_custom_call.1} parent=31 // pred_fallthru
          _
        %s216 = sand.u32 %s41, 1
        %s217 = scalar_lea.sflag [#allocation4], %s216
        %s218 = sand.u32 %s41, 1
        %s219 = smul.addr %s218, 80
        %s220 = scalar_lea.vmem [#allocation3], %s219
        %p221 = pneg %p54
        %p222 = pneg %p51
        %p223 = pneg %p80
        %p224 = pneg %p77
        %p225 = scmp.lt.s32.totalorder %s26, 0
        %s226 = scalar_select %p225, %s26, 0
        %s227 = smul.addr %s226, 8
        %s228 = scalar_lea.vmem %s2, %s227
        %p229 = pneg %p106
        %p230 = pneg %p103
        %p231 = pneg %p134
        %p232 = pneg %p131
        %s233 = sand.u32 %s121, 1
        %s234 = scalar_lea.sflag [#allocation5], %s233
        %s235 = sand.u32 %s121, 1
        %s236 = smul.addr %s235, 64
        %s237 = scalar_lea.vmem [#allocation8], %s236
        %p238 = scmp.lt.s32.totalorder %s26, 0
        %s239 = scalar_select %p238, %s26, 0
        %s240 = smul.addr %s239, 8
        %s241 = scalar_lea.vmem %s2, %s240
        %v243 = vld [vmem:[%s207] sm:$0xff]
        %v244 = vld [vmem:[%s207 + $0x8] sm:$0xff]
        %v245 = vld [vmem:[%s207 + $0x10] sm:$0xff]
        %v246 = vld [vmem:[%s207 + $0x18] sm:$0xff]
        %v247 = vld [vmem:[%s207 + $0x28] sm:$0xff]
        %v248 = vld [vmem:[%s207 + $0x30] sm:$0xff]
        %v249 = vld [vmem:[%s207 + $0x38] sm:$0xff]
        %v250 = vld [vmem:[%s207 + $0x40] sm:$0xff]
        %v251 = vld [vmem:[#allocation6] sm:$0xf]
        %v260 = vunpack.c.l.b16 %v243
        %v261 = vunpack.c.h.b16 %v243
        %v262 = vunpack.c.l.b16 %v244
        %v263 = vunpack.c.h.b16 %v244
        %v264 = vunpack.c.l.b16 %v245
        %v265 = vunpack.c.h.b16 %v245
        %v266 = vunpack.c.l.b16 %v246
        %v267 = vunpack.c.h.b16 %v246
        %v268 = vunpack.c.l.b16 %v247
        %v269 = vunpack.c.h.b16 %v247
        %v270 = vunpack.c.l.b16 %v248
        %v271 = vunpack.c.h.b16 %v248
        %v272 = vunpack.c.l.b16 %v249
        %v273 = vunpack.c.h.b16 %v249
        %v274 = vunpack.c.l.b16 %v250
        %v275 = vunpack.c.h.b16 %v250
        %v276 = vpack.c.b16 %v268, %v260
        %v277 = vpack.c.b16 %v269, %v261
        %v278 = vpack.c.b16 %v270, %v262
        %v279 = vpack.c.b16 %v271, %v263
        %v280 = vpack.c.b16 %v272, %v264
        %v281 = vpack.c.b16 %v273, %v265
        %v282 = vpack.c.b16 %v274, %v266
        %v283 = vpack.c.b16 %v275, %v267
        %vm292 = vcmask 130048
        %v294 = vsel %vm292, %v251, 0
        %296 = vmatprep.subr.bf16.mxu0 %v277
        %297 = vmatpush1.bf16.msra.mxu0 %v276
        %298 = vmatprep.subr.bf16.mxu0 0
        %299 = vmatpush1.bf16.msra.mxu0 0
        %300 = vmatprep.subr.bf16.mxu0 0
        %301 = vmatpush1.bf16.msra.mxu0 0
        %302 = vmatprep.subr.bf16.mxu0 0
        %303 = vmatpush1.bf16.msra.mxu0 0
        %304 = vmatprep.subr.bf16.mxu0 0
        %305 = vmatpush1.bf16.msra.mxu0 0
        %306 = vmatprep.subr.bf16.mxu0 0
        %307 = vmatpush1.bf16.msra.mxu0 0
        %308 = vmatprep.subr.bf16.mxu0 0
        %309 = vmatpush1.bf16.msra.mxu0 0
        %310 = vmatprep.subr.bf16.mxu0 0
        %311 = vmatpush1.bf16.msra.mxu0 0
        %312 = vmatprep.subr.bf16.mxu0 0
        %313 = vmatpush1.bf16.msra.mxu0 0
        %314 = vmatprep.subr.bf16.mxu0 0
        %315 = vmatpush1.bf16.msra.mxu0 0
        %316 = vmatprep.subr.bf16.mxu0 0
        %317 = vmatpush1.bf16.msra.mxu0 0
        %318 = vmatprep.subr.bf16.mxu0 0
        %319 = vmatpush1.bf16.msra.mxu0 0
        %320 = vmatprep.subr.bf16.mxu0 0
        %321 = vmatpush1.bf16.msra.mxu0 0
        %322 = vmatprep.subr.bf16.mxu0 0
        %323 = vmatpush1.bf16.msra.mxu0 0
        %324 = vmatprep.subr.bf16.mxu0 0
        %325 = vmatpush1.bf16.msra.mxu0 0
        %326 = vmatprep.subr.bf16.mxu0 0
        %327 = vmatpush1.bf16.msra.mxu0 0
        %328 = vmatprep.mubr.bf16.mxu0 0
        %329 = vmatmul.mubr.bf16.gmra.mrb[0].mxu0 %v294
        %v330 = vpop.f32.mrb[0].mxu0
        %v331 = vadd.f32 0.0, %v330
        %v332 = vpop.f32.mrb[0].mxu0
        %v333 = vadd.f32 0.0, %v332
        %v334 = vpop.f32.mrb[0].mxu0
        %v335 = vpop.f32.mrb[0].mxu0
        %336 = vdwg.mxu0
        %337 = vmatprep.subr.bf16.mxu0 %v279
        %338 = vmatpush1.bf16.msra.mxu0 %v278
        %339 = vmatprep.subr.bf16.mxu0 0
        %340 = vmatpush1.bf16.msra.mxu0 0
        %341 = vmatprep.subr.bf16.mxu0 0
        %342 = vmatpush1.bf16.msra.mxu0 0
        %343 = vmatprep.subr.bf16.mxu0 0
        %344 = vmatpush1.bf16.msra.mxu0 0
        %345 = vmatprep.subr.bf16.mxu0 0
        %346 = vmatpush1.bf16.msra.mxu0 0
        %347 = vmatprep.subr.bf16.mxu0 0
        %348 = vmatpush1.bf16.msra.mxu0 0
        %349 = vmatprep.subr.bf16.mxu0 0
        %350 = vmatpush1.bf16.msra.mxu0 0
        %351 = vmatprep.subr.bf16.mxu0 0
        %352 = vmatpush1.bf16.msra.mxu0 0
        %353 = vmatprep.subr.bf16.mxu0 0
        %354 = vmatpush1.bf16.msra.mxu0 0
        %355 = vmatprep.subr.bf16.mxu0 0
        %356 = vmatpush1.bf16.msra.mxu0 0
        %357 = vmatprep.subr.bf16.mxu0 0
        %358 = vmatpush1.bf16.msra.mxu0 0
        %359 = vmatprep.subr.bf16.mxu0 0
        %360 = vmatpush1.bf16.msra.mxu0 0
        %361 = vmatprep.subr.bf16.mxu0 0
        %362 = vmatpush1.bf16.msra.mxu0 0
        %363 = vmatprep.subr.bf16.mxu0 0
        %364 = vmatpush1.bf16.msra.mxu0 0
        %365 = vmatprep.subr.bf16.mxu0 0
        %366 = vmatpush1.bf16.msra.mxu0 0
        %367 = vmatprep.subr.bf16.mxu0 0
        %368 = vmatpush1.bf16.msra.mxu0 0
        %369 = vmatprep.mubr.bf16.mxu0 0
        %370 = vmatmul.mubr.bf16.gmra.mrb[0].mxu0 %v294
        %v371 = vpop.f32.mrb[0].mxu0
        %v372 = vadd.f32 0.0, %v371
        %v373 = vpop.f32.mrb[0].mxu0
        %v374 = vadd.f32 0.0, %v373
        %v375 = vpop.f32.mrb[0].mxu0
        %v376 = vpop.f32.mrb[0].mxu0
        %377 = vdwg.mxu0
        %378 = vmatprep.subr.bf16.mxu0 %v281
        %379 = vmatpush1.bf16.msra.mxu0 %v280
        %380 = vmatprep.subr.bf16.mxu0 0
        %381 = vmatpush1.bf16.msra.mxu0 0
        %382 = vmatprep.subr.bf16.mxu0 0
        %383 = vmatpush1.bf16.msra.mxu0 0
        %384 = vmatprep.subr.bf16.mxu0 0
        %385 = vmatpush1.bf16.msra.mxu0 0
        %386 = vmatprep.subr.bf16.mxu0 0
        %387 = vmatpush1.bf16.msra.mxu0 0
        %388 = vmatprep.subr.bf16.mxu0 0
        %389 = vmatpush1.bf16.msra.mxu0 0
        %390 = vmatprep.subr.bf16.mxu0 0
        %391 = vmatpush1.bf16.msra.mxu0 0
        %392 = vmatprep.subr.bf16.mxu0 0
        %393 = vmatpush1.bf16.msra.mxu0 0
        %394 = vmatprep.subr.bf16.mxu0 0
        %395 = vmatpush1.bf16.msra.mxu0 0
        %396 = vmatprep.subr.bf16.mxu0 0
        %397 = vmatpush1.bf16.msra.mxu0 0
        %398 = vmatprep.subr.bf16.mxu0 0
        %399 = vmatpush1.bf16.msra.mxu0 0
        %400 = vmatprep.subr.bf16.mxu0 0
        %401 = vmatpush1.bf16.msra.mxu0 0
        %402 = vmatprep.subr.bf16.mxu0 0
        %403 = vmatpush1.bf16.msra.mxu0 0
        %404 = vmatprep.subr.bf16.mxu0 0
        %405 = vmatpush1.bf16.msra.mxu0 0
        %406 = vmatprep.subr.bf16.mxu0 0
        %407 = vmatpush1.bf16.msra.mxu0 0
        %408 = vmatprep.subr.bf16.mxu0 0
        %409 = vmatpush1.bf16.msra.mxu0 0
        %410 = vmatprep.mubr.bf16.mxu0 0
        %411 = vmatmul.mubr.bf16.gmra.mrb[0].mxu0 %v294
        %v412 = vpop.f32.mrb[0].mxu0
        %v413 = vadd.f32 0.0, %v412
        %v414 = vpop.f32.mrb[0].mxu0
        %v415 = vadd.f32 0.0, %v414
        %v416 = vpop.f32.mrb[0].mxu0
        %v417 = vpop.f32.mrb[0].mxu0
        %418 = vdwg.mxu0
        %419 = vmatprep.subr.bf16.mxu0 %v283
        %420 = vmatpush1.bf16.msra.mxu0 %v282
        %421 = vmatprep.subr.bf16.mxu0 0
        %422 = vmatpush1.bf16.msra.mxu0 0
        %423 = vmatprep.subr.bf16.mxu0 0
        %424 = vmatpush1.bf16.msra.mxu0 0
        %425 = vmatprep.subr.bf16.mxu0 0
        %426 = vmatpush1.bf16.msra.mxu0 0
        %427 = vmatprep.subr.bf16.mxu0 0
        %428 = vmatpush1.bf16.msra.mxu0 0
        %429 = vmatprep.subr.bf16.mxu0 0
        %430 = vmatpush1.bf16.msra.mxu0 0
        %431 = vmatprep.subr.bf16.mxu0 0
        %432 = vmatpush1.bf16.msra.mxu0 0
        %433 = vmatprep.subr.bf16.mxu0 0
        %434 = vmatpush1.bf16.msra.mxu0 0
        %435 = vmatprep.subr.bf16.mxu0 0
        %436 = vmatpush1.bf16.msra.mxu0 0
        %437 = vmatprep.subr.bf16.mxu0 0
        %438 = vmatpush1.bf16.msra.mxu0 0
        %439 = vmatprep.subr.bf16.mxu0 0
        %440 = vmatpush1.bf16.msra.mxu0 0
        %441 = vmatprep.subr.bf16.mxu0 0
        %442 = vmatpush1.bf16.msra.mxu0 0
        %443 = vmatprep.subr.bf16.mxu0 0
        %444 = vmatpush1.bf16.msra.mxu0 0
        %445 = vmatprep.subr.bf16.mxu0 0
        %446 = vmatpush1.bf16.msra.mxu0 0
        %447 = vmatprep.subr.bf16.mxu0 0
        %448 = vmatpush1.bf16.msra.mxu0 0
        %449 = vmatprep.subr.bf16.mxu0 0
        %450 = vmatpush1.bf16.msra.mxu0 0
        %451 = vmatprep.mubr.bf16.mxu0 0
        %452 = vmatmul.mubr.bf16.gmra.mrb[0].mxu0 %v294
        %v453 = vpop.f32.mrb[0].mxu0
        %v454 = vadd.f32 0.0, %v453
        %v455 = vpop.f32.mrb[0].mxu0
        %v456 = vadd.f32 0.0, %v455
        %v457 = vpop.f32.mrb[0].mxu0
        %v458 = vpop.f32.mrb[0].mxu0
        %459 = vdwg.mxu0
        %460 = vst [vmem:[#allocation2] sm:$0xff] %v331
        %461 = vst [vmem:[#allocation2 + $0x8] sm:$0xff] %v333
        %462 = vst [vmem:[#allocation2 + $0x10] sm:$0xff] %v372
        %463 = vst [vmem:[#allocation2 + $0x18] sm:$0xff] %v374
        %464 = vst [vmem:[#allocation2 + $0x20] sm:$0xff] %v413
        %465 = vst [vmem:[#allocation2 + $0x28] sm:$0xff] %v415
        %466 = vst [vmem:[#allocation2 + $0x30] sm:$0xff] %v454
        %467 = vst [vmem:[#allocation2 + $0x38] sm:$0xff] %v456
        %v468 = vld [vmem:[%s207] sm:$0xff]
        %v469 = vld [vmem:[%s207 + $0x8] sm:$0xff]
        %v470 = vld [vmem:[%s207 + $0x10] sm:$0xff]
        %v471 = vld [vmem:[%s207 + $0x18] sm:$0xff]
        %v472 = vld [vmem:[%s207 + $0x20] sm:$0xf]
        %v473 = vld [vmem:[%s207 + $0x28] sm:$0xff]
        %v474 = vld [vmem:[%s207 + $0x30] sm:$0xff]
        %v475 = vld [vmem:[%s207 + $0x38] sm:$0xff]
        %v476 = vld [vmem:[%s207 + $0x40] sm:$0xff]
        %v477 = vld [vmem:[%s207 + $0x48] sm:$0xf]
        %s478 = scalar_lea.vmem [#allocation6], 4
        %v479 = vld [vmem:[%s478] sm:$0xf]
        %v490 = vunpack.c.l.b16 %v468
        %v491 = vunpack.c.h.b16 %v468
        %v492 = vunpack.c.l.b16 %v469
        %v493 = vunpack.c.h.b16 %v469
        %v494 = vunpack.c.l.b16 %v470
        %v495 = vunpack.c.h.b16 %v470
        %v496 = vunpack.c.l.b16 %v471
        %v497 = vunpack.c.h.b16 %v471
        %v498 = vunpack.c.l.b16 %v472
        %v499 = vunpack.c.l.b16 %v473
        %v500 = vunpack.c.h.b16 %v473
        %v501 = vunpack.c.l.b16 %v474
        %v502 = vunpack.c.h.b16 %v474
        %v503 = vunpack.c.l.b16 %v475
        %v504 = vunpack.c.h.b16 %v475
        %v505 = vunpack.c.l.b16 %v476
        %v506 = vunpack.c.h.b16 %v476
        %v507 = vunpack.c.l.b16 %v477
        %v508 = vpack.c.b16 %v499, %v490
        %v509 = vpack.c.b16 %v500, %v491
        %v510 = vpack.c.b16 %v501, %v492
        %v511 = vpack.c.b16 %v502, %v493
        %v512 = vpack.c.b16 %v503, %v494
        %v513 = vpack.c.b16 %v504, %v495
        %v514 = vpack.c.b16 %v505, %v496
        %v515 = vpack.c.b16 %v506, %v497
        %v516 = vpack.c.b16 %v507, %v498
        %517 = vrot.lane.b32.xlu0 %v508, 64
        %v518 = vpop.permute.xlu0 %517
        %519 = vrot.lane.b32.xlu0 %v509, 64
        %v520 = vpop.permute.xlu0 %519
        %521 = vrot.lane.b32.xlu0 %v510, 64
        %v522 = vpop.permute.xlu0 %521
        %523 = vrot.lane.b32.xlu0 %v511, 64
        %v524 = vpop.permute.xlu0 %523
        %525 = vrot.lane.b32.xlu0 %v512, 64
        %v526 = vpop.permute.xlu0 %525
        %527 = vrot.lane.b32.xlu0 %v513, 64
        %v528 = vpop.permute.xlu0 %527
        %529 = vrot.lane.b32.xlu0 %v514, 64
        %v530 = vpop.permute.xlu0 %529
        %531 = vrot.lane.b32.xlu0 %v515, 64
        %v532 = vpop.permute.xlu0 %531
        %533 = vrot.lane.b32.xlu0 %v516, 64
        %v534 = vpop.permute.xlu0 %533
        %vm535 = vcmask 523264
        %v536 = vsel %vm535, %v518, %v520
        %v537 = vsel %vm535, %v520, %v522
        %v538 = vsel %vm535, %v522, %v524
        %v539 = vsel %vm535, %v524, %v526
        %v540 = vsel %vm535, %v526, %v528
        %v541 = vsel %vm535, %v528, %v530
        %v542 = vsel %vm535, %v530, %v532
        %v543 = vsel %vm535, %v532, %v534
        %v553 = vsel %vm292, %v479, 0
        %555 = vmatprep.subr.bf16.mxu0 %v537
        %556 = vmatpush1.bf16.msra.mxu0 %v536
        %557 = vmatprep.subr.bf16.mxu0 0
        %558 = vmatpush1.bf16.msra.mxu0 0
        %559 = vmatprep.subr.bf16.mxu0 0
        %560 = vmatpush1.bf16.msra.mxu0 0
        %561 = vmatprep.subr.bf16.mxu0 0
        %562 = vmatpush1.bf16.msra.mxu0 0
        %563 = vmatprep.subr.bf16.mxu0 0
        %564 = vmatpush1.bf16.msra.mxu0 0
        %565 = vmatprep.subr.bf16.mxu0 0
        %566 = vmatpush1.bf16.msra.mxu0 0
        %567 = vmatprep.subr.bf16.mxu0 0
        %568 = vmatpush1.bf16.msra.mxu0 0
        %569 = vmatprep.subr.bf16.mxu0 0
        %570 = vmatpush1.bf16.msra.mxu0 0
        %571 = vmatprep.subr.bf16.mxu0 0
        %572 = vmatpush1.bf16.msra.mxu0 0
        %573 = vmatprep.subr.bf16.mxu0 0
        %574 = vmatpush1.bf16.msra.mxu0 0
        %575 = vmatprep.subr.bf16.mxu0 0
        %576 = vmatpush1.bf16.msra.mxu0 0
        %577 = vmatprep.subr.bf16.mxu0 0
        %578 = vmatpush1.bf16.msra.mxu0 0
        %579 = vmatprep.subr.bf16.mxu0 0
        %580 = vmatpush1.bf16.msra.mxu0 0
        %581 = vmatprep.subr.bf16.mxu0 0
        %582 = vmatpush1.bf16.msra.mxu0 0
        %583 = vmatprep.subr.bf16.mxu0 0
        %584 = vmatpush1.bf16.msra.mxu0 0
        %585 = vmatprep.subr.bf16.mxu0 0
        %586 = vmatpush1.bf16.msra.mxu0 0
        %587 = vmatprep.mubr.bf16.mxu0 0
        %588 = vmatmul.mubr.bf16.gmra.mrb[0].mxu0 %v553
        %v589 = vpop.f32.mrb[0].mxu0
        %v590 = vadd.f32 0.0, %v589
        %v591 = vpop.f32.mrb[0].mxu0
        %v592 = vadd.f32 0.0, %v591
        %v593 = vpop.f32.mrb[0].mxu0
        %v594 = vpop.f32.mrb[0].mxu0
        %595 = vdwg.mxu0
        %596 = vmatprep.subr.bf16.mxu0 %v539
        %597 = vmatpush1.bf16.msra.mxu0 %v538
        %598 = vmatprep.subr.bf16.mxu0 0
        %599 = vmatpush1.bf16.msra.mxu0 0
        %600 = vmatprep.subr.bf16.mxu0 0
        %601 = vmatpush1.bf16.msra.mxu0 0
        %602 = vmatprep.subr.bf16.mxu0 0
        %603 = vmatpush1.bf16.msra.mxu0 0
        %604 = vmatprep.subr.bf16.mxu0 0
        %605 = vmatpush1.bf16.msra.mxu0 0
        %606 = vmatprep.subr.bf16.mxu0 0
        %607 = vmatpush1.bf16.msra.mxu0 0
        %608 = vmatprep.subr.bf16.mxu0 0
        %609 = vmatpush1.bf16.msra.mxu0 0
        %610 = vmatprep.subr.bf16.mxu0 0
        %611 = vmatpush1.bf16.msra.mxu0 0
        %612 = vmatprep.subr.bf16.mxu0 0
        %613 = vmatpush1.bf16.msra.mxu0 0
        %614 = vmatprep.subr.bf16.mxu0 0
        %615 = vmatpush1.bf16.msra.mxu0 0
        %616 = vmatprep.subr.bf16.mxu0 0
        %617 = vmatpush1.bf16.msra.mxu0 0
        %618 = vmatprep.subr.bf16.mxu0 0
        %619 = vmatpush1.bf16.msra.mxu0 0
        %620 = vmatprep.subr.bf16.mxu0 0
        %621 = vmatpush1.bf16.msra.mxu0 0
        %622 = vmatprep.subr.bf16.mxu0 0
        %623 = vmatpush1.bf16.msra.mxu0 0
        %624 = vmatprep.subr.bf16.mxu0 0
        %625 = vmatpush1.bf16.msra.mxu0 0
        %626 = vmatprep.subr.bf16.mxu0 0
        %627 = vmatpush1.bf16.msra.mxu0 0
        %628 = vmatprep.mubr.bf16.mxu0 0
        %629 = vmatmul.mubr.bf16.gmra.mrb[0].mxu0 %v553
        %v630 = vpop.f32.mrb[0].mxu0
        %v631 = vadd.f32 0.0, %v630
        %v632 = vpop.f32.mrb[0].mxu0
        %v633 = vadd.f32 0.0, %v632
        %v634 = vpop.f32.mrb[0].mxu0
        %v635 = vpop.f32.mrb[0].mxu0
        %636 = vdwg.mxu0
        %637 = vmatprep.subr.bf16.mxu0 %v541
        %638 = vmatpush1.bf16.msra.mxu0 %v540
        %639 = vmatprep.subr.bf16.mxu0 0
        %640 = vmatpush1.bf16.msra.mxu0 0
        %641 = vmatprep.subr.bf16.mxu0 0
        %642 = vmatpush1.bf16.msra.mxu0 0
        %643 = vmatprep.subr.bf16.mxu0 0
        %644 = vmatpush1.bf16.msra.mxu0 0
        %645 = vmatprep.subr.bf16.mxu0 0
        %646 = vmatpush1.bf16.msra.mxu0 0
        %647 = vmatprep.subr.bf16.mxu0 0
        %648 = vmatpush1.bf16.msra.mxu0 0
        %649 = vmatprep.subr.bf16.mxu0 0
        %650 = vmatpush1.bf16.msra.mxu0 0
        %651 = vmatprep.subr.bf16.mxu0 0
        %652 = vmatpush1.bf16.msra.mxu0 0
        %653 = vmatprep.subr.bf16.mxu0 0
        %654 = vmatpush1.bf16.msra.mxu0 0
        %655 = vmatprep.subr.bf16.mxu0 0
        %656 = vmatpush1.bf16.msra.mxu0 0
        %657 = vmatprep.subr.bf16.mxu0 0
        %658 = vmatpush1.bf16.msra.mxu0 0
        %659 = vmatprep.subr.bf16.mxu0 0
        %660 = vmatpush1.bf16.msra.mxu0 0
        %661 = vmatprep.subr.bf16.mxu0 0
        %662 = vmatpush1.bf16.msra.mxu0 0
        %663 = vmatprep.subr.bf16.mxu0 0
        %664 = vmatpush1.bf16.msra.mxu0 0
        %665 = vmatprep.subr.bf16.mxu0 0
        %666 = vmatpush1.bf16.msra.mxu0 0
        %667 = vmatprep.subr.bf16.mxu0 0
        %668 = vmatpush1.bf16.msra.mxu0 0
        %669 = vmatprep.mubr.bf16.mxu0 0
        %670 = vmatmul.mubr.bf16.gmra.mrb[0].mxu0 %v553
        %v671 = vpop.f32.mrb[0].mxu0
        %v672 = vadd.f32 0.0, %v671
        %v673 = vpop.f32.mrb[0].mxu0
        %v674 = vadd.f32 0.0, %v673
        %v675 = vpop.f32.mrb[0].mxu0
        %v676 = vpop.f32.mrb[0].mxu0
        %677 = vdwg.mxu0
        %678 = vmatprep.subr.bf16.mxu0 %v543
        %679 = vmatpush1.bf16.msra.mxu0 %v542
        %680 = vmatprep.subr.bf16.mxu0 0
        %681 = vmatpush1.bf16.msra.mxu0 0
        %682 = vmatprep.subr.bf16.mxu0 0
        %683 = vmatpush1.bf16.msra.mxu0 0
        %684 = vmatprep.subr.bf16.mxu0 0
        %685 = vmatpush1.bf16.msra.mxu0 0
        %686 = vmatprep.subr.bf16.mxu0 0
        %687 = vmatpush1.bf16.msra.mxu0 0
        %688 = vmatprep.subr.bf16.mxu0 0
        %689 = vmatpush1.bf16.msra.mxu0 0
        %690 = vmatprep.subr.bf16.mxu0 0
        %691 = vmatpush1.bf16.msra.mxu0 0
        %692 = vmatprep.subr.bf16.mxu0 0
        %693 = vmatpush1.bf16.msra.mxu0 0
        %694 = vmatprep.subr.bf16.mxu0 0
        %695 = vmatpush1.bf16.msra.mxu0 0
        %696 = vmatprep.subr.bf16.mxu0 0
        %697 = vmatpush1.bf16.msra.mxu0 0
        %698 = vmatprep.subr.bf16.mxu0 0
        %699 = vmatpush1.bf16.msra.mxu0 0
        %700 = vmatprep.subr.bf16.mxu0 0
        %701 = vmatpush1.bf16.msra.mxu0 0
        %702 = vmatprep.subr.bf16.mxu0 0
        %703 = vmatpush1.bf16.msra.mxu0 0
        %704 = vmatprep.subr.bf16.mxu0 0
        %705 = vmatpush1.bf16.msra.mxu0 0
        %706 = vmatprep.subr.bf16.mxu0 0
        %707 = vmatpush1.bf16.msra.mxu0 0
        %708 = vmatprep.subr.bf16.mxu0 0
        %709 = vmatpush1.bf16.msra.mxu0 0
        %710 = vmatprep.mubr.bf16.mxu0 0
        %711 = vmatmul.mubr.bf16.gmra.mrb[0].mxu0 %v553
        %v712 = vpop.f32.mrb[0].mxu0
        %v713 = vadd.f32 0.0, %v712
        %v714 = vpop.f32.mrb[0].mxu0
        %v715 = vadd.f32 0.0, %v714
        %v716 = vpop.f32.mrb[0].mxu0
        %v717 = vpop.f32.mrb[0].mxu0
        %718 = vdwg.mxu0
        %v719 = vld [vmem:[#allocation2] sm:$0xff]
        %v720 = vld [vmem:[#allocation2 + $0x8] sm:$0xff]
        %v721 = vld [vmem:[#allocation2 + $0x10] sm:$0xff]
        %v722 = vld [vmem:[#allocation2 + $0x18] sm:$0xff]
        %v723 = vld [vmem:[#allocation2 + $0x20] sm:$0xff]
        %v724 = vld [vmem:[#allocation2 + $0x28] sm:$0xff]
        %v725 = vld [vmem:[#allocation2 + $0x30] sm:$0xff]
        %v726 = vld [vmem:[#allocation2 + $0x38] sm:$0xff]
        %v727 = vadd.f32 %v719, %v590
        %v728 = vadd.f32 %v720, %v592
        %v729 = vadd.f32 %v721, %v631
        %v730 = vadd.f32 %v722, %v633
        %v731 = vadd.f32 %v723, %v672
        %v732 = vadd.f32 %v724, %v674
        %v733 = vadd.f32 %v725, %v713
        %v734 = vadd.f32 %v726, %v715
        %735 = vst [vmem:[#allocation2] sm:$0xff] %v727
        %736 = vst [vmem:[#allocation2 + $0x8] sm:$0xff] %v728
        %737 = vst [vmem:[#allocation2 + $0x10] sm:$0xff] %v729
        %738 = vst [vmem:[#allocation2 + $0x18] sm:$0xff] %v730
        %739 = vst [vmem:[#allocation2 + $0x20] sm:$0xff] %v731
        %740 = vst [vmem:[#allocation2 + $0x28] sm:$0xff] %v732
        %741 = vst [vmem:[#allocation2 + $0x30] sm:$0xff] %v733
        %742 = vst [vmem:[#allocation2 + $0x38] sm:$0xff] %v734
        %v743 = vld [vmem:[%s207 + $0x4] sm:$0xff]
        %v744 = vld [vmem:[%s207 + $0xc] sm:$0xff]
        %v745 = vld [vmem:[%s207 + $0x14] sm:$0xff]
        %v746 = vld [vmem:[%s207 + $0x1c] sm:$0xff]
        %v747 = vld [vmem:[%s207 + $0x2c] sm:$0xff]
        %v748 = vld [vmem:[%s207 + $0x34] sm:$0xff]
        %v749 = vld [vmem:[%s207 + $0x3c] sm:$0xff]
        %v750 = vld [vmem:[%s207 + $0x44] sm:$0xff]
        %s751 = scalar_lea.vmem [#allocation6], 8
        %v752 = vld [vmem:[%s751] sm:$0xf]
        %v761 = vunpack.c.l.b16 %v743
        %v762 = vunpack.c.h.b16 %v743
        %v763 = vunpack.c.l.b16 %v744
        %v764 = vunpack.c.h.b16 %v744
        %v765 = vunpack.c.l.b16 %v745
        %v766 = vunpack.c.h.b16 %v745
        %v767 = vunpack.c.l.b16 %v746
        %v768 = vunpack.c.h.b16 %v746
        %v769 = vunpack.c.l.b16 %v747
        %v770 = vunpack.c.h.b16 %v747
        %v771 = vunpack.c.l.b16 %v748
        %v772 = vunpack.c.h.b16 %v748
        %v773 = vunpack.c.l.b16 %v749
        %v774 = vunpack.c.h.b16 %v749
        %v775 = vunpack.c.l.b16 %v750
        %v776 = vunpack.c.h.b16 %v750
        %v777 = vpack.c.b16 %v769, %v761
        %v778 = vpack.c.b16 %v770, %v762
        %v779 = vpack.c.b16 %v771, %v763
        %v780 = vpack.c.b16 %v772, %v764
        %v781 = vpack.c.b16 %v773, %v765
        %v782 = vpack.c.b16 %v774, %v766
        %v783 = vpack.c.b16 %v775, %v767
        %v784 = vpack.c.b16 %v776, %v768
        %v794 = vsel %vm292, %v752, 0
        %796 = vmatprep.subr.bf16.mxu0 %v778
        %797 = vmatpush1.bf16.msra.mxu0 %v777
        %798 = vmatprep.subr.bf16.mxu0 0
        %799 = vmatpush1.bf16.msra.mxu0 0
        %800 = vmatprep.subr.bf16.mxu0 0
        %801 = vmatpush1.bf16.msra.mxu0 0
        %802 = vmatprep.subr.bf16.mxu0 0
        %803 = vmatpush1.bf16.msra.mxu0 0
        %804 = vmatprep.subr.bf16.mxu0 0
        %805 = vmatpush1.bf16.msra.mxu0 0
        %806 = vmatprep.subr.bf16.mxu0 0
        %807 = vmatpush1.bf16.msra.mxu0 0
        %808 = vmatprep.subr.bf16.mxu0 0
        %809 = vmatpush1.bf16.msra.mxu0 0
        %810 = vmatprep.subr.bf16.mxu0 0
        %811 = vmatpush1.bf16.msra.mxu0 0
        %812 = vmatprep.subr.bf16.mxu0 0
        %813 = vmatpush1.bf16.msra.mxu0 0
        %814 = vmatprep.subr.bf16.mxu0 0
        %815 = vmatpush1.bf16.msra.mxu0 0
        %816 = vmatprep.subr.bf16.mxu0 0
        %817 = vmatpush1.bf16.msra.mxu0 0
        %818 = vmatprep.subr.bf16.mxu0 0
        %819 = vmatpush1.bf16.msra.mxu0 0
        %820 = vmatprep.subr.bf16.mxu0 0
        %821 = vmatpush1.bf16.msra.mxu0 0
        %822 = vmatprep.subr.bf16.mxu0 0
        %823 = vmatpush1.bf16.msra.mxu0 0
        %824 = vmatprep.subr.bf16.mxu0 0
        %825 = vmatpush1.bf16.msra.mxu0 0
        %826 = vmatprep.subr.bf16.mxu0 0
        %827 = vmatpush1.bf16.msra.mxu0 0
        %828 = vmatprep.mubr.bf16.mxu0 0
        %829 = vmatmul.mubr.bf16.gmra.mrb[0].mxu0 %v794
        %v830 = vpop.f32.mrb[0].mxu0
        %v831 = vadd.f32 0.0, %v830
        %v832 = vpop.f32.mrb[0].mxu0
        %v833 = vadd.f32 0.0, %v832
        %v834 = vpop.f32.mrb[0].mxu0
        %v835 = vpop.f32.mrb[0].mxu0
        %836 = vdwg.mxu0
        %837 = vmatprep.subr.bf16.mxu0 %v780
        %838 = vmatpush1.bf16.msra.mxu0 %v779
        %839 = vmatprep.subr.bf16.mxu0 0
        %840 = vmatpush1.bf16.msra.mxu0 0
        %841 = vmatprep.subr.bf16.mxu0 0
        %842 = vmatpush1.bf16.msra.mxu0 0
        %843 = vmatprep.subr.bf16.mxu0 0
        %844 = vmatpush1.bf16.msra.mxu0 0
        %845 = vmatprep.subr.bf16.mxu0 0
        %846 = vmatpush1.bf16.msra.mxu0 0
        %847 = vmatprep.subr.bf16.mxu0 0
        %848 = vmatpush1.bf16.msra.mxu0 0
        %849 = vmatprep.subr.bf16.mxu0 0
        %850 = vmatpush1.bf16.msra.mxu0 0
        %851 = vmatprep.subr.bf16.mxu0 0
        %852 = vmatpush1.bf16.msra.mxu0 0
        %853 = vmatprep.subr.bf16.mxu0 0
        %854 = vmatpush1.bf16.msra.mxu0 0
        %855 = vmatprep.subr.bf16.mxu0 0
        %856 = vmatpush1.bf16.msra.mxu0 0
        %857 = vmatprep.subr.bf16.mxu0 0
        %858 = vmatpush1.bf16.msra.mxu0 0
        %859 = vmatprep.subr.bf16.mxu0 0
        %860 = vmatpush1.bf16.msra.mxu0 0
        %861 = vmatprep.subr.bf16.mxu0 0
        %862 = vmatpush1.bf16.msra.mxu0 0
        %863 = vmatprep.subr.bf16.mxu0 0
        %864 = vmatpush1.bf16.msra.mxu0 0
        %865 = vmatprep.subr.bf16.mxu0 0
        %866 = vmatpush1.bf16.msra.mxu0 0
        %867 = vmatprep.subr.bf16.mxu0 0
        %868 = vmatpush1.bf16.msra.mxu0 0
        %869 = vmatprep.mubr.bf16.mxu0 0
        %870 = vmatmul.mubr.bf16.gmra.mrb[0].mxu0 %v794
        %v871 = vpop.f32.mrb[0].mxu0
        %v872 = vadd.f32 0.0, %v871
        %v873 = vpop.f32.mrb[0].mxu0
        %v874 = vadd.f32 0.0, %v873
        %v875 = vpop.f32.mrb[0].mxu0
        %v876 = vpop.f32.mrb[0].mxu0
        %877 = vdwg.mxu0
        %878 = vmatprep.subr.bf16.mxu0 %v782
        %879 = vmatpush1.bf16.msra.mxu0 %v781
        %880 = vmatprep.subr.bf16.mxu0 0
        %881 = vmatpush1.bf16.msra.mxu0 0
        %882 = vmatprep.subr.bf16.mxu0 0
        %883 = vmatpush1.bf16.msra.mxu0 0
        %884 = vmatprep.subr.bf16.mxu0 0
        %885 = vmatpush1.bf16.msra.mxu0 0
        %886 = vmatprep.subr.bf16.mxu0 0
        %887 = vmatpush1.bf16.msra.mxu0 0
        %888 = vmatprep.subr.bf16.mxu0 0
        %889 = vmatpush1.bf16.msra.mxu0 0
        %890 = vmatprep.subr.bf16.mxu0 0
        %891 = vmatpush1.bf16.msra.mxu0 0
        %892 = vmatprep.subr.bf16.mxu0 0
        %893 = vmatpush1.bf16.msra.mxu0 0
        %894 = vmatprep.subr.bf16.mxu0 0
        %895 = vmatpush1.bf16.msra.mxu0 0
        %896 = vmatprep.subr.bf16.mxu0 0
        %897 = vmatpush1.bf16.msra.mxu0 0
        %898 = vmatprep.subr.bf16.mxu0 0
        %899 = vmatpush1.bf16.msra.mxu0 0
        %900 = vmatprep.subr.bf16.mxu0 0
        %901 = vmatpush1.bf16.msra.mxu0 0
        %902 = vmatprep.subr.bf16.mxu0 0
        %903 = vmatpush1.bf16.msra.mxu0 0
        %904 = vmatprep.subr.bf16.mxu0 0
        %905 = vmatpush1.bf16.msra.mxu0 0
        %906 = vmatprep.subr.bf16.mxu0 0
        %907 = vmatpush1.bf16.msra.mxu0 0
        %908 = vmatprep.subr.bf16.mxu0 0
        %909 = vmatpush1.bf16.msra.mxu0 0
        %910 = vmatprep.mubr.bf16.mxu0 0
        %911 = vmatmul.mubr.bf16.gmra.mrb[0].mxu0 %v794
        %v912 = vpop.f32.mrb[0].mxu0
        %v913 = vadd.f32 0.0, %v912
        %v914 = vpop.f32.mrb[0].mxu0
        %v915 = vadd.f32 0.0, %v914
        %v916 = vpop.f32.mrb[0].mxu0
        %v917 = vpop.f32.mrb[0].mxu0
        %918 = vdwg.mxu0
        %919 = vmatprep.subr.bf16.mxu0 %v784
        %920 = vmatpush1.bf16.msra.mxu0 %v783
        %921 = vmatprep.subr.bf16.mxu0 0
        %922 = vmatpush1.bf16.msra.mxu0 0
        %923 = vmatprep.subr.bf16.mxu0 0
        %924 = vmatpush1.bf16.msra.mxu0 0
        %925 = vmatprep.subr.bf16.mxu0 0
        %926 = vmatpush1.bf16.msra.mxu0 0
        %927 = vmatprep.subr.bf16.mxu0 0
        %928 = vmatpush1.bf16.msra.mxu0 0
        %929 = vmatprep.subr.bf16.mxu0 0
        %930 = vmatpush1.bf16.msra.mxu0 0
        %931 = vmatprep.subr.bf16.mxu0 0
        %932 = vmatpush1.bf16.msra.mxu0 0
        %933 = vmatprep.subr.bf16.mxu0 0
        %934 = vmatpush1.bf16.msra.mxu0 0
        %935 = vmatprep.subr.bf16.mxu0 0
        %936 = vmatpush1.bf16.msra.mxu0 0
        %937 = vmatprep.subr.bf16.mxu0 0
        %938 = vmatpush1.bf16.msra.mxu0 0
        %939 = vmatprep.subr.bf16.mxu0 0
        %940 = vmatpush1.bf16.msra.mxu0 0
        %941 = vmatprep.subr.bf16.mxu0 0
        %942 = vmatpush1.bf16.msra.mxu0 0
        %943 = vmatprep.subr.bf16.mxu0 0
        %944 = vmatpush1.bf16.msra.mxu0 0
        %945 = vmatprep.subr.bf16.mxu0 0
        %946 = vmatpush1.bf16.msra.mxu0 0
        %947 = vmatprep.subr.bf16.mxu0 0
        %948 = vmatpush1.bf16.msra.mxu0 0
        %949 = vmatprep.subr.bf16.mxu0 0
        %950 = vmatpush1.bf16.msra.mxu0 0
        %951 = vmatprep.mubr.bf16.mxu0 0
        %952 = vmatmul.mubr.bf16.gmra.mrb[0].mxu0 %v794
        %v953 = vpop.f32.mrb[0].mxu0
        %v954 = vadd.f32 0.0, %v953
        %v955 = vpop.f32.mrb[0].mxu0
        %v956 = vadd.f32 0.0, %v955
        %v957 = vpop.f32.mrb[0].mxu0
        %v958 = vpop.f32.mrb[0].mxu0
        %959 = vdwg.mxu0
        %v960 = vld [vmem:[#allocation2] sm:$0xff]
        %v961 = vld [vmem:[#allocation2 + $0x8] sm:$0xff]
        %v962 = vld [vmem:[#allocation2 + $0x10] sm:$0xff]
        %v963 = vld [vmem:[#allocation2 + $0x18] sm:$0xff]
        %v964 = vld [vmem:[#allocation2 + $0x20] sm:$0xff]
        %v965 = vld [vmem:[#allocation2 + $0x28] sm:$0xff]
        %v966 = vld [vmem:[#allocation2 + $0x30] sm:$0xff]
        %v967 = vld [vmem:[#allocation2 + $0x38] sm:$0xff]
        %v968 = vadd.f32 %v960, %v831
        %v969 = vadd.f32 %v961, %v833
        %v970 = vadd.f32 %v962, %v872
        %v971 = vadd.f32 %v963, %v874
        %v972 = vadd.f32 %v964, %v913
        %v973 = vadd.f32 %v965, %v915
        %v974 = vadd.f32 %v966, %v954
        %v975 = vadd.f32 %v967, %v956
        %976 = vst [vmem:[#allocation2] sm:$0xff] %v968
        %977 = vst [vmem:[#allocation2 + $0x8] sm:$0xff] %v969
        %978 = vst [vmem:[#allocation2 + $0x10] sm:$0xff] %v970
        %979 = vst [vmem:[#allocation2 + $0x18] sm:$0xff] %v971
        %980 = vst [vmem:[#allocation2 + $0x20] sm:$0xff] %v972
        %981 = vst [vmem:[#allocation2 + $0x28] sm:$0xff] %v973
        %982 = vst [vmem:[#allocation2 + $0x30] sm:$0xff] %v974
        %983 = vst [vmem:[#allocation2 + $0x38] sm:$0xff] %v975
        %v984 = vld [vmem:[%s207 + $0x4] sm:$0xff]
        %v985 = vld [vmem:[%s207 + $0xc] sm:$0xff]
        %v986 = vld [vmem:[%s207 + $0x14] sm:$0xff]
        %v987 = vld [vmem:[%s207 + $0x1c] sm:$0xff]
        %v988 = vld [vmem:[%s207 + $0x24] sm:$0xf]
        %v989 = vld [vmem:[%s207 + $0x2c] sm:$0xff]
        %v990 = vld [vmem:[%s207 + $0x34] sm:$0xff]
        %v991 = vld [vmem:[%s207 + $0x3c] sm:$0xff]
        %v992 = vld [vmem:[%s207 + $0x44] sm:$0xff]
        %v993 = vld [vmem:[%s207 + $0x4c] sm:$0xf]
        %s994 = scalar_lea.vmem [#allocation6], 12
        %v995 = vld [vmem:[%s994] sm:$0xf]
        %v1006 = vunpack.c.l.b16 %v984
        %v1007 = vunpack.c.h.b16 %v984
        %v1008 = vunpack.c.l.b16 %v985
        %v1009 = vunpack.c.h.b16 %v985
        %v1010 = vunpack.c.l.b16 %v986
        %v1011 = vunpack.c.h.b16 %v986
        %v1012 = vunpack.c.l.b16 %v987
        %v1013 = vunpack.c.h.b16 %v987
        %v1014 = vunpack.c.l.b16 %v988
        %v1015 = vunpack.c.l.b16 %v989
        %v1016 = vunpack.c.h.b16 %v989
        %v1017 = vunpack.c.l.b16 %v990
        %v1018 = vunpack.c.h.b16 %v990
        %v1019 = vunpack.c.l.b16 %v991
        %v1020 = vunpack.c.h.b16 %v991
        %v1021 = vunpack.c.l.b16 %v992
        %v1022 = vunpack.c.h.b16 %v992
        %v1023 = vunpack.c.l.b16 %v993
        %v1024 = vpack.c.b16 %v1015, %v1006
        %v1025 = vpack.c.b16 %v1016, %v1007
        %v1026 = vpack.c.b16 %v1017, %v1008
        %v1027 = vpack.c.b16 %v1018, %v1009
        %v1028 = vpack.c.b16 %v1019, %v1010
        %v1029 = vpack.c.b16 %v1020, %v1011
        %v1030 = vpack.c.b16 %v1021, %v1012
        %v1031 = vpack.c.b16 %v1022, %v1013
        %v1032 = vpack.c.b16 %v1023, %v1014
        %1033 = vrot.lane.b32.xlu0 %v1024, 64
        %v1034 = vpop.permute.xlu0 %1033
        %1035 = vrot.lane.b32.xlu0 %v1025, 64
        %v1036 = vpop.permute.xlu0 %1035
        %1037 = vrot.lane.b32.xlu0 %v1026, 64
        %v1038 = vpop.permute.xlu0 %1037
        %1039 = vrot.lane.b32.xlu0 %v1027, 64
        %v1040 = vpop.permute.xlu0 %1039
        %1041 = vrot.lane.b32.xlu0 %v1028, 64
        %v1042 = vpop.permute.xlu0 %1041
        %1043 = vrot.lane.b32.xlu0 %v1029, 64
        %v1044 = vpop.permute.xlu0 %1043
        %1045 = vrot.lane.b32.xlu0 %v1030, 64
        %v1046 = vpop.permute.xlu0 %1045
        %1047 = vrot.lane.b32.xlu0 %v1031, 64
        %v1048 = vpop.permute.xlu0 %1047
        %1049 = vrot.lane.b32.xlu0 %v1032, 64
        %v1050 = vpop.permute.xlu0 %1049
        %v1051 = vsel %vm535, %v1034, %v1036
        %v1052 = vsel %vm535, %v1036, %v1038
        %v1053 = vsel %vm535, %v1038, %v1040
        %v1054 = vsel %vm535, %v1040, %v1042
        %v1055 = vsel %vm535, %v1042, %v1044
        %v1056 = vsel %vm535, %v1044, %v1046
        %v1057 = vsel %vm535, %v1046, %v1048
        %v1058 = vsel %vm535, %v1048, %v1050
        %v1068 = vsel %vm292, %v995, 0
        %1070 = vmatprep.subr.bf16.mxu0 %v1052
        %1071 = vmatpush1.bf16.msra.mxu0 %v1051
        %1072 = vmatprep.subr.bf16.mxu0 0
        %1073 = vmatpush1.bf16.msra.mxu0 0
        %1074 = vmatprep.subr.bf16.mxu0 0
        %1075 = vmatpush1.bf16.msra.mxu0 0
        %1076 = vmatprep.subr.bf16.mxu0 0
        %1077 = vmatpush1.bf16.msra.mxu0 0
        %1078 = vmatprep.subr.bf16.mxu0 0
        %1079 = vmatpush1.bf16.msra.mxu0 0
        %1080 = vmatprep.subr.bf16.mxu0 0
        %1081 = vmatpush1.bf16.msra.mxu0 0
        %1082 = vmatprep.subr.bf16.mxu0 0
        %1083 = vmatpush1.bf16.msra.mxu0 0
        %1084 = vmatprep.subr.bf16.mxu0 0
        %1085 = vmatpush1.bf16.msra.mxu0 0
        %1086 = vmatprep.subr.bf16.mxu0 0
        %1087 = vmatpush1.bf16.msra.mxu0 0
        %1088 = vmatprep.subr.bf16.mxu0 0
        %1089 = vmatpush1.bf16.msra.mxu0 0
        %1090 = vmatprep.subr.bf16.mxu0 0
        %1091 = vmatpush1.bf16.msra.mxu0 0
        %1092 = vmatprep.subr.bf16.mxu0 0
        %1093 = vmatpush1.bf16.msra.mxu0 0
        %1094 = vmatprep.subr.bf16.mxu0 0
        %1095 = vmatpush1.bf16.msra.mxu0 0
        %1096 = vmatprep.subr.bf16.mxu0 0
        %1097 = vmatpush1.bf16.msra.mxu0 0
        %1098 = vmatprep.subr.bf16.mxu0 0
        %1099 = vmatpush1.bf16.msra.mxu0 0
        %1100 = vmatprep.subr.bf16.mxu0 0
        %1101 = vmatpush1.bf16.msra.mxu0 0
        %1102 = vmatprep.mubr.bf16.mxu0 0
        %1103 = vmatmul.mubr.bf16.gmra.mrb[0].mxu0 %v1068
        %v1104 = vpop.f32.mrb[0].mxu0
        %v1105 = vadd.f32 0.0, %v1104
        %v1106 = vpop.f32.mrb[0].mxu0
        %v1107 = vadd.f32 0.0, %v1106
        %v1108 = vpop.f32.mrb[0].mxu0
        %v1109 = vpop.f32.mrb[0].mxu0
        %1110 = vdwg.mxu0
        %1111 = vmatprep.subr.bf16.mxu0 %v1054
        %1112 = vmatpush1.bf16.msra.mxu0 %v1053
        %1113 = vmatprep.subr.bf16.mxu0 0
        %1114 = vmatpush1.bf16.msra.mxu0 0
        %1115 = vmatprep.subr.bf16.mxu0 0
        %1116 = vmatpush1.bf16.msra.mxu0 0
        %1117 = vmatprep.subr.bf16.mxu0 0
        %1118 = vmatpush1.bf16.msra.mxu0 0
        %1119 = vmatprep.subr.bf16.mxu0 0
        %1120 = vmatpush1.bf16.msra.mxu0 0
        %1121 = vmatprep.subr.bf16.mxu0 0
        %1122 = vmatpush1.bf16.msra.mxu0 0
        %1123 = vmatprep.subr.bf16.mxu0 0
        %1124 = vmatpush1.bf16.msra.mxu0 0
        %1125 = vmatprep.subr.bf16.mxu0 0
        %1126 = vmatpush1.bf16.msra.mxu0 0
        %1127 = vmatprep.subr.bf16.mxu0 0
        %1128 = vmatpush1.bf16.msra.mxu0 0
        %1129 = vmatprep.subr.bf16.mxu0 0
        %1130 = vmatpush1.bf16.msra.mxu0 0
        %1131 = vmatprep.subr.bf16.mxu0 0
        %1132 = vmatpush1.bf16.msra.mxu0 0
        %1133 = vmatprep.subr.bf16.mxu0 0
        %1134 = vmatpush1.bf16.msra.mxu0 0
        %1135 = vmatprep.subr.bf16.mxu0 0
        %1136 = vmatpush1.bf16.msra.mxu0 0
        %1137 = vmatprep.subr.bf16.mxu0 0
        %1138 = vmatpush1.bf16.msra.mxu0 0
        %1139 = vmatprep.subr.bf16.mxu0 0
        %1140 = vmatpush1.bf16.msra.mxu0 0
        %1141 = vmatprep.subr.bf16.mxu0 0
        %1142 = vmatpush1.bf16.msra.mxu0 0
        %1143 = vmatprep.mubr.bf16.mxu0 0
        %1144 = vmatmul.mubr.bf16.gmra.mrb[0].mxu0 %v1068
        %v1145 = vpop.f32.mrb[0].mxu0
        %v1146 = vadd.f32 0.0, %v1145
        %v1147 = vpop.f32.mrb[0].mxu0
        %v1148 = vadd.f32 0.0, %v1147
        %v1149 = vpop.f32.mrb[0].mxu0
        %v1150 = vpop.f32.mrb[0].mxu0
        %1151 = vdwg.mxu0
        %1152 = vmatprep.subr.bf16.mxu0 %v1056
        %1153 = vmatpush1.bf16.msra.mxu0 %v1055
        %1154 = vmatprep.subr.bf16.mxu0 0
        %1155 = vmatpush1.bf16.msra.mxu0 0
        %1156 = vmatprep.subr.bf16.mxu0 0
        %1157 = vmatpush1.bf16.msra.mxu0 0
        %1158 = vmatprep.subr.bf16.mxu0 0
        %1159 = vmatpush1.bf16.msra.mxu0 0
        %1160 = vmatprep.subr.bf16.mxu0 0
        %1161 = vmatpush1.bf16.msra.mxu0 0
        %1162 = vmatprep.subr.bf16.mxu0 0
        %1163 = vmatpush1.bf16.msra.mxu0 0
        %1164 = vmatprep.subr.bf16.mxu0 0
        %1165 = vmatpush1.bf16.msra.mxu0 0
        %1166 = vmatprep.subr.bf16.mxu0 0
        %1167 = vmatpush1.bf16.msra.mxu0 0
        %1168 = vmatprep.subr.bf16.mxu0 0
        %1169 = vmatpush1.bf16.msra.mxu0 0
        %1170 = vmatprep.subr.bf16.mxu0 0
        %1171 = vmatpush1.bf16.msra.mxu0 0
        %1172 = vmatprep.subr.bf16.mxu0 0
        %1173 = vmatpush1.bf16.msra.mxu0 0
        %1174 = vmatprep.subr.bf16.mxu0 0
        %1175 = vmatpush1.bf16.msra.mxu0 0
        %1176 = vmatprep.subr.bf16.mxu0 0
        %1177 = vmatpush1.bf16.msra.mxu0 0
        %1178 = vmatprep.subr.bf16.mxu0 0
        %1179 = vmatpush1.bf16.msra.mxu0 0
        %1180 = vmatprep.subr.bf16.mxu0 0
        %1181 = vmatpush1.bf16.msra.mxu0 0
        %1182 = vmatprep.subr.bf16.mxu0 0
        %1183 = vmatpush1.bf16.msra.mxu0 0
        %1184 = vmatprep.mubr.bf16.mxu0 0
        %1185 = vmatmul.mubr.bf16.gmra.mrb[0].mxu0 %v1068
        %v1186 = vpop.f32.mrb[0].mxu0
        %v1187 = vadd.f32 0.0, %v1186
        %v1188 = vpop.f32.mrb[0].mxu0
        %v1189 = vadd.f32 0.0, %v1188
        %v1190 = vpop.f32.mrb[0].mxu0
        %v1191 = vpop.f32.mrb[0].mxu0
        %1192 = vdwg.mxu0
        %1193 = vmatprep.subr.bf16.mxu0 %v1058
        %1194 = vmatpush1.bf16.msra.mxu0 %v1057
        %1195 = vmatprep.subr.bf16.mxu0 0
        %1196 = vmatpush1.bf16.msra.mxu0 0
        %1197 = vmatprep.subr.bf16.mxu0 0
        %1198 = vmatpush1.bf16.msra.mxu0 0
        %1199 = vmatprep.subr.bf16.mxu0 0
        %1200 = vmatpush1.bf16.msra.mxu0 0
        %1201 = vmatprep.subr.bf16.mxu0 0
        %1202 = vmatpush1.bf16.msra.mxu0 0
        %1203 = vmatprep.subr.bf16.mxu0 0
        %1204 = vmatpush1.bf16.msra.mxu0 0
        %1205 = vmatprep.subr.bf16.mxu0 0
        %1206 = vmatpush1.bf16.msra.mxu0 0
        %1207 = vmatprep.subr.bf16.mxu0 0
        %1208 = vmatpush1.bf16.msra.mxu0 0
        %1209 = vmatprep.subr.bf16.mxu0 0
        %1210 = vmatpush1.bf16.msra.mxu0 0
        %1211 = vmatprep.subr.bf16.mxu0 0
        %1212 = vmatpush1.bf16.msra.mxu0 0
        %1213 = vmatprep.subr.bf16.mxu0 0
        %1214 = vmatpush1.bf16.msra.mxu0 0
        %1215 = vmatprep.subr.bf16.mxu0 0
        %1216 = vmatpush1.bf16.msra.mxu0 0
        %1217 = vmatprep.subr.bf16.mxu0 0
        %1218 = vmatpush1.bf16.msra.mxu0 0
        %1219 = vmatprep.subr.bf16.mxu0 0
        %1220 = vmatpush1.bf16.msra.mxu0 0
        %1221 = vmatprep.subr.bf16.mxu0 0
        %1222 = vmatpush1.bf16.msra.mxu0 0
        %1223 = vmatprep.subr.bf16.mxu0 0
        %1224 = vmatpush1.bf16.msra.mxu0 0
        %1225 = vmatprep.mubr.bf16.mxu0 0
        %1226 = vmatmul.mubr.bf16.gmra.mrb[0].mxu0 %v1068
        %v1227 = vpop.f32.mrb[0].mxu0
        %v1228 = vadd.f32 0.0, %v1227
        %v1229 = vpop.f32.mrb[0].mxu0
        %v1230 = vadd.f32 0.0, %v1229
        %v1231 = vpop.f32.mrb[0].mxu0
        %v1232 = vpop.f32.mrb[0].mxu0
        %1233 = vdwg.mxu0
        %v1234 = vld [vmem:[#allocation2] sm:$0xff]
        %v1235 = vld [vmem:[#allocation2 + $0x8] sm:$0xff]
        %v1236 = vld [vmem:[#allocation2 + $0x10] sm:$0xff]
        %v1237 = vld [vmem:[#allocation2 + $0x18] sm:$0xff]
        %v1238 = vld [vmem:[#allocation2 + $0x20] sm:$0xff]
        %v1239 = vld [vmem:[#allocation2 + $0x28] sm:$0xff]
        %v1240 = vld [vmem:[#allocation2 + $0x30] sm:$0xff]
        %v1241 = vld [vmem:[#allocation2 + $0x38] sm:$0xff]
        %v1242 = vadd.f32 %v1234, %v1105
        %v1243 = vadd.f32 %v1235, %v1107
        %v1244 = vadd.f32 %v1236, %v1146
        %v1245 = vadd.f32 %v1237, %v1148
        %v1246 = vadd.f32 %v1238, %v1187
        %v1247 = vadd.f32 %v1239, %v1189
        %v1248 = vadd.f32 %v1240, %v1228
        %v1249 = vadd.f32 %v1241, %v1230
        %1250 = vst [vmem:[#allocation2] sm:$0xff] %v1242
        %1251 = vst [vmem:[#allocation2 + $0x8] sm:$0xff] %v1243
        %1252 = vst [vmem:[#allocation2 + $0x10] sm:$0xff] %v1244
        %1253 = vst [vmem:[#allocation2 + $0x18] sm:$0xff] %v1245
        %1254 = vst [vmem:[#allocation2 + $0x20] sm:$0xff] %v1246
        %1255 = vst [vmem:[#allocation2 + $0x28] sm:$0xff] %v1247
        %1256 = vst [vmem:[#allocation2 + $0x30] sm:$0xff] %v1248
        %1257 = vst [vmem:[#allocation2 + $0x38] sm:$0xff] %v1249
        %v1258 = vld [vmem:[#allocation2] sm:$0xff]
        %v1259 = vld [vmem:[#allocation2 + $0x8] sm:$0xff]
        %v1260 = vld [vmem:[#allocation2 + $0x10] sm:$0xff]
        %v1261 = vld [vmem:[#allocation2 + $0x18] sm:$0xff]
        %v1262 = vld [vmem:[#allocation2 + $0x20] sm:$0xff]
        %v1263 = vld [vmem:[#allocation2 + $0x28] sm:$0xff]
        %v1264 = vld [vmem:[#allocation2 + $0x30] sm:$0xff]
        %v1265 = vld [vmem:[#allocation2 + $0x38] sm:$0xff]
        %v1266 = vld [vmem:[%s241] sm:$0xff]
        %1268 = vset.pattern.permute.xlu0 0
        %1269 = vperm.xlu0 %1268, %v1266
        %v1270 = vpop.permute.xlu0 %1269
        %v1272 = vadd.f32 %v1258, %v1270
        %v1273 = vadd.f32 %v1259, %v1270
        %v1274 = vadd.f32 %v1260, %v1270
        %v1275 = vadd.f32 %v1261, %v1270
        %v1276 = vadd.f32 %v1262, %v1270
        %v1277 = vadd.f32 %v1263, %v1270
        %v1278 = vadd.f32 %v1264, %v1270
        %v1279 = vadd.f32 %v1265, %v1270
        %v1280 = vmax.f32 %v1272, 0.0
        %v1281 = vmax.f32 %v1273, 0.0
        %v1282 = vmax.f32 %v1274, 0.0
        %v1283 = vmax.f32 %v1275, 0.0
        %v1284 = vmax.f32 %v1276, 0.0
        %v1285 = vmax.f32 %v1277, 0.0
        %v1286 = vmax.f32 %v1278, 0.0
        %v1287 = vmax.f32 %v1279, 0.0
        %v1288 = vadd.f32 %v1280, %v1281
        %v1289 = vadd.f32 %v1288, %v1282
        %v1290 = vadd.f32 %v1289, %v1283
        %v1291 = vadd.f32 %v1290, %v1284
        %v1292 = vadd.f32 %v1291, %v1285
        %v1293 = vadd.f32 %v1292, %v1286
        %v1294 = vadd.f32 %v1293, %v1287
        %1295 = vadd.xlane.f32.xlu0 %v1294
        %v1296 = vpop.xlane.xlu0 %1295
        %v1297 = vmul.f32 %v1296, 0.0009765625
        %v1298 = vmul.f32 %v1280, %v1280
        %v1299 = vmul.f32 %v1281, %v1281
        %v1300 = vmul.f32 %v1282, %v1282
        %v1301 = vmul.f32 %v1283, %v1283
        %v1302 = vmul.f32 %v1284, %v1284
        %v1303 = vmul.f32 %v1285, %v1285
        %v1304 = vmul.f32 %v1286, %v1286
        %v1305 = vmul.f32 %v1287, %v1287
        %v1306 = vadd.f32 %v1298, %v1299
        %v1307 = vadd.f32 %v1306, %v1300
        %v1308 = vadd.f32 %v1307, %v1301
        %v1309 = vadd.f32 %v1308, %v1302
        %v1310 = vadd.f32 %v1309, %v1303
        %v1311 = vadd.f32 %v1310, %v1304
        %v1312 = vadd.f32 %v1311, %v1305
        %1313 = vadd.xlane.f32.xlu0 %v1312
        %v1314 = vpop.xlane.xlu0 %1313
        %v1315 = vmul.f32 %v1314, 0.0009765625
        %v1316 = vmul.f32 %v1297, %v1297
        %v1317 = vsub.f32 %v1315, %v1316
        %v1318 = vmax.f32 %v1317, 0.0
        %v1319 = vsub.f32 %v1280, %v1297
        %v1320 = vsub.f32 %v1281, %v1297
        %v1321 = vsub.f32 %v1282, %v1297
        %v1322 = vsub.f32 %v1283, %v1297
        %v1323 = vsub.f32 %v1284, %v1297
        %v1324 = vsub.f32 %v1285, %v1297
        %v1325 = vsub.f32 %v1286, %v1297
        %v1326 = vsub.f32 %v1287, %v1297
        %v1327 = vadd.f32 %v1318, 1e-05
        %v1328 = vrsqrt.pop %v1327
        %v1329 = vmul.f32 %v1319, %v1328
        %v1330 = vmul.f32 %v1320, %v1328
        %v1331 = vmul.f32 %v1321, %v1328
        %v1332 = vmul.f32 %v1322, %v1328
        %v1333 = vmul.f32 %v1323, %v1328
        %v1334 = vmul.f32 %v1324, %v1328
        %v1335 = vmul.f32 %v1325, %v1328
        %v1336 = vmul.f32 %v1326, %v1328
        %1337 = vst [vmem:[%s237] sm:$0xff] %v1329
        %1338 = vst [vmem:[%s237 + $0x8] sm:$0xff] %v1330
        %1339 = vst [vmem:[%s237 + $0x10] sm:$0xff] %v1331
        %1340 = vst [vmem:[%s237 + $0x18] sm:$0xff] %v1332
        %1341 = vst [vmem:[%s237 + $0x20] sm:$0xff] %v1333
        %1342 = vst [vmem:[%s237 + $0x28] sm:$0xff] %v1334
        %1343 = vst [vmem:[%s237 + $0x30] sm:$0xff] %v1335
        %1344 = vst [vmem:[%s237 + $0x38] sm:$0xff] %v1336
        %s1345 = sand.u32 %s121, 1
        %s1346 = scalar_lea.sflag [#allocation5], %s1345
        %s1347 = sand.u32 %s121, 1
        %s1348 = smul.addr %s1347, 64
        %s1349 = scalar_lea.vmem [#allocation8], %s1348
        // Predicated region
        $region41: #{tpu_custom_call.1} parent=31 // pred_check
          %p1350 = pneg %p131
        $region42: #{tpu_custom_call.1} parent=31 // pred_check_branch
          %1352 = sbr.rel (%p1350) target = $region44
        $region43: #{tpu_custom_call.1} parent=31 // pred_region
          %s1354 = ssub.s32 1024, 1024
          %1355 = vsyncadd %s1346, %s1354
          %s1356 = smul.addr %s26, 8
          %s1357 = smul.addr %s25, 8
          %s1358 = sadd.s32 %s1356, %s1357
          %s1359 = smul.addr %s1358, 128
          %s1360 = scalar_lea.hbm %s3, %s1359
          %s1362 = sshll.u32 %s1349, 4
          %s1363 = int_to_ptr.vmem [resolvable:$true] %s1362
          %1365 = dma.vmem_to_hbm [thread:$0]  %s1363, 1024, %s1360, %s1346
        $region44: #{tpu_custom_call.1} parent=31 // pred_fallthru
          _
      $region32: #{tpu_custom_call.1} parent=5 // pred_fallthru
        _
      %p1366 = scmp.le.s32.totalorder 2, %s16
      // Predicated region
      $region45: #{tpu_custom_call.1} parent=5 // pred_check
        %p1367 = pneg %p1366
      $region46: #{tpu_custom_call.1} parent=5 // pred_check_branch
        %1369 = sbr.rel (%p1367) target = $region48
      $region47: #{tpu_custom_call.1} parent=5 // pred_region
        %s1370 = ssub.s32 %s16, 2
        // Predicated region
        $region49: #{tpu_custom_call.1} parent=47 // pred_check
          %p1371 = pneg %p137
        $region50: #{tpu_custom_call.1} parent=47 // pred_check_branch
          %1373 = sbr.rel (%p1371) target = $region52
        $region51: #{tpu_custom_call.1} parent=47 // pred_region
          %s1374 = sand.u32 %s122, 1
          %s1375 = scalar_lea.sflag [#allocation5], %s1374
          %s1376 = sand.u32 %s122, 1
          %s1377 = smul.addr %s1376, 64
          %s1378 = scalar_lea.vmem [#allocation8], %s1377
          %1379 = dma.done %s1375, 1024
        $region52: #{tpu_custom_call.1} parent=47 // pred_fallthru
          _
      $region48: #{tpu_custom_call.1} parent=5 // pred_fallthru
        _
    $region6: #{tpu_custom_call.1} parent=1 // loop_footer
      %s20 = sadd.s32 1, %s16
    $region7: #{tpu_custom_call.1} parent=1 // loop_footer_branch
      %15 = sbr.rel target = $region3
    $region8: #{tpu_custom_call.1} parent=1 // loop_exit
      _
    %1380 = vsyncpa [#allocation4], 1
    %s1381 = scalar_lea.sflag [#allocation4], 1
    %1382 = vsyncpa %s1381, 1
    %1383 = vsyncpa [#allocation7], 1
    %1384 = vsyncpa [#allocation5], 1
    %s1385 = scalar_lea.sflag [#allocation5], 1
    %1386 = vsyncpa %s1385, 1

</llo_original>
